<compile_context>
chip_gen: v7x
topology: tpu7x:2x2x1
jax: 0.10.0
libtpu: 0.0.40
codegen_flags: <defaults>
</compile_context>

<pallas_src>
import jax
import jax.numpy as jnp
import numpy as np
from jax.experimental import pallas as pl
from jax.experimental.pallas import tpu as pltpu


# ----------------------------------------------------------------------------
# entmax-1.5 (exact, sort-based) -- parameter-side glue, plain JAX.
# ----------------------------------------------------------------------------
def entmax15(x, axis):
    x = x / 2.0
    x = x - jnp.max(x, axis=axis, keepdims=True)
    xs = -jnp.sort(-x, axis=axis)                      # descending sort
    d = x.shape[axis]
    shape = [1] * x.ndim
    shape[axis] = d
    rho = jnp.arange(1, d + 1, dtype=x.dtype).reshape(shape)
    mean = jnp.cumsum(xs, axis=axis) / rho
    mean_sq = jnp.cumsum(xs * xs, axis=axis) / rho
    ss = rho * (mean_sq - mean * mean)
    delta = (1.0 - ss) / rho
    tau = mean - jnp.sqrt(jnp.clip(delta, 0.0))
    support_size = jnp.sum((tau <= xs).astype(jnp.int32), axis=axis, keepdims=True)
    tau_star = jnp.take_along_axis(tau, support_size - 1, axis=axis)
    return jnp.clip(x - tau_star, 0.0) ** 2


# ----------------------------------------------------------------------------
# Pallas kernel: a chain of wide matmul stages + softmax / log-softmax.
# ----------------------------------------------------------------------------
def make_neurcam_kernel(relu_flags, mxu_dtype):
    """Ref order: x (TB, D), [W_s, b_s] per stage, out (TB, 2K)."""
    n_stages = len(relu_flags)

    def kernel(x_ref, *refs):
        out_ref = refs[-1]
        h = x_ref[...]                                   # (TB, D), f32
        for s in range(n_stages):
            w_ref = refs[2 * s]
            b_ref = refs[2 * s + 1]
            if relu_flags[s]:
                h = jnp.maximum(h, 0.0)                  # f32 ReLU (VPU)
            h = jnp.dot(h.astype(mxu_dtype), w_ref[...],
                        preferred_element_type=jnp.float32) + b_ref[...]

        logits = h                                       # (TB, K), f32
        # --- softmax / log-softmax over clusters (f32) ---
        m = jnp.max(logits, axis=-1, keepdims=True)
        z = logits - m
        e = jnp.exp(z)
        denom = jnp.sum(e, axis=-1, keepdims=True)
        inv = pl.reciprocal(denom, approx=True)          # EUP slot
        inv = inv * (2.0 - denom * inv)                  # Newton step 1
        inv = inv * (2.0 - denom * inv)                  # Newton step 2 -> f32-exact
        out_ref[...] = jnp.concatenate([e * inv, z - jnp.log(denom)], axis=-1)

    return kernel


# ----------------------------------------------------------------------------
# Wrapper: parameter preprocessing (entmax, weight folding) + pallas_call
# ----------------------------------------------------------------------------
def neurcam_forward(x, params, *, block_b=128, mxu_dtype=jnp.bfloat16):
    x = jnp.asarray(x, jnp.float32)
    B, D = x.shape
    c1 = params["o1_selection"].shape[0]
    c2 = params["o2_selection"].shape[0]
    K = (params["o1_out_W"].shape[-1] if c1 > 0 else params["o2_out_W"].shape[-1])
    o1_mlp = params["o1_mlp"]
    o2_mlp = params["o2_mlp"]
    L = len(o1_mlp) if c1 > 0 else len(o2_mlp)   # number of MLP linear layers

    # ---- parameter-side glue (tiny, plain JAX) ----
    stages = []   # list of (W, b_row, relu_before)

    # Stage 0: fold selection + first MLP layer for all channels of both orders
    # into one (D, (C1+C2)*H0) matrix; lane order is [o1 ch0..C1-1 | o2 ch0..C2-1],
    # channel-major then hidden index.
    A_parts, b_parts = [], []
    if c1 > 0:
        sel1 = entmax15(params["o1_selection"] / params["o1_temp"], axis=1)   # (C1, D)
        w0_1, b0_1 = o1_mlp[0]                                                # (1, H0), (H0,)
        H0 = w0_1.shape[1]
        A_parts.append(jnp.einsum("ci,j->icj", sel1, w0_1[0]).reshape(D, c1 * H0))
        b_parts.append(jnp.tile(b0_1, c1))
    if c2 > 0:
        sel2 = entmax15(params["o2_selection"] / params["o2_temp"], axis=1)   # (C2, D, 2)
        w0_2, b0_2 = o2_mlp[0]                                                # (2, H0), (H0,)
        H0 = w0_2.shape[1]
        A_parts.append((jnp.einsum("ci,j->icj", sel2[:, :, 0], w0_2[0])
                        + jnp.einsum("ci,j->icj", sel2[:, :, 1], w0_2[1])
                        ).reshape(D, c2 * H0))
        b_parts.append(jnp.tile(b0_2, c2))
    A = jnp.concatenate(A_parts, axis=1)
    b_first = jnp.concatenate(b_parts).reshape(1, -1)
    stages.append((A, b_first, False))

    # Middle hidden layers: one block-diagonal matmul per layer (shared weights
    # replicated per channel on the diagonal), keeping the wide lane layout.
    for l in range(1, L - 1):
        blocks, b_tiles = [], []
        if c1 > 0:
            W1, b1 = o1_mlp[l]
            blocks += [W1] * c1
            b_tiles.append(jnp.tile(b1, c1))
        if c2 > 0:
            W2, b2 = o2_mlp[l]
            blocks += [W2] * c2
            b_tiles.append(jnp.tile(b2, c2))
        Wbd = jax.scipy.linalg.block_diag(*blocks)
        bbd = jnp.concatenate(b_tiles).reshape(1, -1)
        stages.append((Wbd, bbd, True))

    # Final stage: compose the last MLP linear with the per-channel output
    # Linears (both linear, no ReLU between) -> one ((C1+C2)*H_last, K) matmul
    # that also sums over channels.
    if L >= 2:
        comp_parts = []
        b_fin = jnp.zeros((K,), jnp.float32)
        if c1 > 0:
            Wl1, bl1 = o1_mlp[-1]                                             # (H_last, nb)
            comp_parts.append(jnp.einsum("hn,cnk->chk", Wl1, params["o1_out_W"])
                              .reshape(c1 * Wl1.shape[0], K))
            b_fin = b_fin + jnp.einsum("n,cnk->k", bl1, params["o1_out_W"]) \
                          + jnp.sum(params["o1_out_b"], axis=0)
        if c2 > 0:
            Wl2, bl2 = o2_mlp[-1]
            comp_parts.append(jnp.einsum("hn,cnk->chk", Wl2, params["o2_out_W"])
                              .reshape(c2 * Wl2.shape[0], K))
            b_fin = b_fin + jnp.einsum("n,cnk->k", bl2, params["o2_out_W"]) \
                          + jnp.sum(params["o2_out_b"], axis=0)
        stages.append((jnp.concatenate(comp_parts, axis=0), b_fin.reshape(1, K), True))
    else:
        # No hidden layers: the whole per-order path is linear; final stage is
        # the channel-stacked output Linears (no ReLU anywhere in this path).
        comp_parts = []
        b_fin = jnp.zeros((K,), jnp.float32)
        if c1 > 0:
            nb = o1_mlp[0][0].shape[1]
            comp_parts.append(params["o1_out_W"].reshape(c1 * nb, K))
            b_fin = b_fin + jnp.sum(params["o1_out_b"], axis=0)
        if c2 > 0:
            nb = o2_mlp[0][0].shape[1]
            comp_parts.append(params["o2_out_W"].reshape(c2 * nb, K))
            b_fin = b_fin + jnp.sum(params["o2_out_b"], axis=0)
        stages.append((jnp.concatenate(comp_parts, axis=0), b_fin.reshape(1, K), False))

    wdt = mxu_dtype
    relu_flags = tuple(r for (_, _, r) in stages)
    weight_args = []
    for (W, b, _) in stages:
        weight_args += [W.astype(wdt), jnp.asarray(b, jnp.float32)]

    # ---- batch tiling ----
    block_b = max(8, (block_b // 8) * 8)
    if B > block_b:
        TB = block_b
        B_pad = int(pl.cdiv(B, TB)) * TB
    else:
        TB = B
        B_pad = B
    x_in = jnp.pad(x, ((0, B_pad - B), (0, 0))) if B_pad != B else x

    def resident_spec(a):
        return pl.BlockSpec(tuple(int(d) for d in a.shape),
                            lambda i, _n=a.ndim: (0,) * _n)

    in_specs = [pl.BlockSpec((TB, D), lambda i: (i, 0))]
    in_specs += [resident_spec(a) for a in weight_args]
    out_spec = pl.BlockSpec((TB, 2 * K), lambda i: (i, 0))

    # advisory cost estimate for XLA's scheduler
    flops_per_row = sum(2 * int(W.shape[0]) * int(W.shape[1]) for (W, _, _) in stages) + 8 * K
    cost = pl.CostEstimate(
        flops=int(B_pad) * int(flops_per_row),
        transcendentals=int(B_pad) * (K + 2),
        bytes_accessed=int(x_in.size) * 4 + int(B_pad) * 2 * K * 4
                       + int(sum(int(a.size) * a.dtype.itemsize for a in weight_args)),
    )

    packed = pl.pallas_call(
        make_neurcam_kernel(relu_flags, mxu_dtype),
        grid=(B_pad // TB,),
        in_specs=in_specs,
        out_specs=out_spec,
        out_shape=jax.ShapeDtypeStruct((B_pad, 2 * K), jnp.float32),
        compiler_params=pltpu.CompilerParams(dimension_semantics=("parallel",)),
        cost_estimate=cost,
    )(x_in, *weight_args)

    return {"assignments": packed[:B, :K], "log_assignments": packed[:B, K:]}


# ----------------------------------------------------------------------------
# Pure-JAX reference (mirrors the PyTorch forward exactly) for validation
# ----------------------------------------------------------------------------
def mlp_apply(h, mlp):
    for i, (W, b) in enumerate(mlp):
        h = h @ W + b
        if i < len(mlp) - 1:
            h = jnp.maximum(h, 0.0)
    return h


def reference_forward(x, params):
    B = x.shape[0]
    K = params["o1_out_W"].shape[-1]
    logits = jnp.zeros((B, K), jnp.float32)

    sel1 = entmax15(params["o1_selection"] / params["o1_temp"], axis=1)
    s1 = x @ sel1.T                                              # (B, C1)
    o1_bases = mlp_apply(s1[..., None], params["o1_mlp"])        # (B, C1, nb)
    for c in range(params["o1_selection"].shape[0]):
        logits = logits + o1_bases[:, c, :] @ params["o1_out_W"][c] + params["o1_out_b"][c]

    sel2 = entmax15(params["o2_selection"] / params["o2_temp"], axis=1)
    s2 = jnp.einsum("bi,nio->bno", x, sel2)                      # (B, C2, 2)
    o2_bases = mlp_apply(s2, params["o2_mlp"])                   # (B, C2, nb)
    for c in range(params["o2_selection"].shape[0]):
        logits = logits + o2_bases[:, c, :] @ params["o2_out_W"][c] + params["o2_out_b"][c]

    return (jax.nn.softmax(logits, axis=-1), jax.nn.log_softmax(logits, axis=-1))


# ----------------------------------------------------------------------------
# Deterministic synthetic parameters
# ----------------------------------------------------------------------------
def init_params(key, input_dim, o1_channels, o2_channels, n_bases, hidden_layers, n_clusters):
    keys = iter(jax.random.split(key, 64))

    def uni(shape, lo=0.0, hi=1.0):
        return jax.random.uniform(next(keys), shape, jnp.float32, lo, hi)

    def make_mlp(in_dim):
        dims = [in_dim] + list(hidden_layers) + [n_bases]
        mlp = []
        for i in range(len(dims) - 1):
            bound = 1.0 / np.sqrt(dims[i])
            W = uni((dims[i], dims[i + 1]), -bound, bound)     # (in, out)
            b = uni((dims[i + 1],), -bound, bound)
            mlp.append((W, b))
        return mlp

    bound_out = 1.0 / np.sqrt(n_bases)
    params = {
        "o1_selection": uni((o1_channels, input_dim)),
        "o1_temp": jnp.float32(1.0),
        "o1_mlp": make_mlp(1),
        "o1_out_W": uni((o1_channels, n_bases, n_clusters), -bound_out, bound_out),
        "o1_out_b": uni((o1_channels, n_clusters), -bound_out, bound_out),
        "o2_selection": uni((o2_channels, input_dim, 2)),
        "o2_temp": jnp.float32(1.0),
        "o2_mlp": make_mlp(2),
        "o2_out_W": uni((o2_channels, n_bases, n_clusters), -bound_out, bound_out),
        "o2_out_b": uni((o2_channels, n_clusters), -bound_out, bound_out),
    }
    # NOTE: centroids (n_clusters, repr_dim) are a module parameter but are not
    # used in forward(); they are omitted here.
    return params


if __name__ == "__main__":
    B, input_dim, repr_dim = 256, 16, 8
    o1_channels, o2_channels = 4, 4
    n_bases, hidden_layers, n_clusters = 8, [32, 32], 8

    key = jax.random.PRNGKey(0)
    kx, kp = jax.random.split(key)
    x = jax.random.normal(kx, (B, input_dim), jnp.float32)
    params = init_params(kp, input_dim, o1_channels, o2_channels,
                         n_bases, hidden_layers, n_clusters)

    ref_assign, ref_log_assign = reference_forward(x, params)

    # f32 MXU path: tight check against the pure-JAX reference.
    out32 = neurcam_forward(x, params, block_b=128, mxu_dtype=jnp.float32)
    jax.block_until_ready(out32)
    np.testing.assert_allclose(np.asarray(out32["assignments"]),
                               np.asarray(ref_assign), atol=2e-5, rtol=2e-5)
    np.testing.assert_allclose(np.asarray(out32["log_assignments"]),
                               np.asarray(ref_log_assign), atol=2e-5, rtol=2e-5)

    # bf16 MXU path (default fast path on v6e/v7x): loose sanity check.
    out16 = neurcam_forward(x, params, block_b=128, mxu_dtype=jnp.bfloat16)
    jax.block_until_ready(out16)
    np.testing.assert_allclose(np.asarray(out16["assignments"]),
                               np.asarray(ref_assign), atol=0.15, rtol=0.15)
    np.testing.assert_allclose(np.asarray(out16["log_assignments"]),
                               np.asarray(ref_log_assign), atol=0.3, rtol=0.15)

    print("KERNEL_OK")
</pallas_src>

<mosaic_0001>
module attributes {stable_mosaic.version = 11 : i64} {
  func.func @kernel(%arg0: i32, %arg1: memref<128x16xf32, #tpu.memory_space<vmem>>, %arg2: memref<16x256xf32, #tpu.memory_space<vmem>>, %arg3: memref<1x256xf32, #tpu.memory_space<vmem>>, %arg4: memref<256x256xf32, #tpu.memory_space<vmem>>, %arg5: memref<1x256xf32, #tpu.memory_space<vmem>>, %arg6: memref<256x8xf32, #tpu.memory_space<vmem>>, %arg7: memref<1x8xf32, #tpu.memory_space<vmem>>, %arg8: memref<128x16xf32, #tpu.memory_space<vmem>>) attributes {dimension_semantics = [#tpu.dimension_semantics<parallel>], iteration_bounds = array<i64: 2>, scalar_prefetch = 0 : i64, scratch_operands = 0 : i64, tpu.core_type = #tpu.core_type<tc>, window_params = [{transform_indices = @transform_0, window_bounds = array<i64: 128, 16>}, {pipeline_mode = #tpu.pipeline_mode<synchronous>, transform_indices = @transform_1, window_bounds = array<i64: 16, 256>}, {pipeline_mode = #tpu.pipeline_mode<synchronous>, transform_indices = @transform_2, window_bounds = array<i64: 1, 256>}, {pipeline_mode = #tpu.pipeline_mode<synchronous>, transform_indices = @transform_3, window_bounds = array<i64: 256, 256>}, {pipeline_mode = #tpu.pipeline_mode<synchronous>, transform_indices = @transform_4, window_bounds = array<i64: 1, 256>}, {pipeline_mode = #tpu.pipeline_mode<synchronous>, transform_indices = @transform_5, window_bounds = array<i64: 256, 8>}, {pipeline_mode = #tpu.pipeline_mode<synchronous>, transform_indices = @transform_6, window_bounds = array<i64: 1, 8>}, {transform_indices = @transform_7, window_bounds = array<i64: 128, 16>}]} {
    %c0 = arith.constant 0 : index
    %c0_0 = arith.constant 0 : index
    %0 = vector.load %arg1[%c0, %c0_0] : memref<128x16xf32, #tpu.memory_space<vmem>>, vector<128x16xf32>
    %c0_1 = arith.constant 0 : index
    %c0_2 = arith.constant 0 : index
    %1 = vector.load %arg2[%c0_1, %c0_2] : memref<16x256xf32, #tpu.memory_space<vmem>>, vector<16x256xf32>
    %cst = arith.constant dense<0.000000e+00> : vector<128x256xf32>
    %2 = tpu.matmul %0, %1, %cst {dimension_numbers = #tpu.dot_dimension_numbers<[1], [0], [0], [1], [0, 0, 1, 1], [], []>} : vector<128x16xf32>, vector<16x256xf32>, vector<128x256xf32> -> vector<128x256xf32>
    %c0_3 = arith.constant 0 : index
    %c0_4 = arith.constant 0 : index
    %3 = vector.load %arg3[%c0_3, %c0_4] : memref<1x256xf32, #tpu.memory_space<vmem>>, vector<1x256xf32>
    %4 = vector.broadcast %3 : vector<1x256xf32> to vector<128x256xf32>
    %5 = arith.addf %2, %4 : vector<128x256xf32>
    %cst_5 = arith.constant 0.000000e+00 : f32
    %6 = vector.broadcast %cst_5 : f32 to vector<128x256xf32>
    %7 = arith.maximumf %5, %6 : vector<128x256xf32>
    %c0_6 = arith.constant 0 : index
    %c0_7 = arith.constant 0 : index
    %8 = vector.load %arg4[%c0_6, %c0_7] : memref<256x256xf32, #tpu.memory_space<vmem>>, vector<256x256xf32>
    %cst_8 = arith.constant dense<0.000000e+00> : vector<128x256xf32>
    %9 = tpu.matmul %7, %8, %cst_8 {dimension_numbers = #tpu.dot_dimension_numbers<[1], [0], [0], [1], [0, 0, 1, 1], [], []>} : vector<128x256xf32>, vector<256x256xf32>, vector<128x256xf32> -> vector<128x256xf32>
    %c0_9 = arith.constant 0 : index
    %c0_10 = arith.constant 0 : index
    %10 = vector.load %arg5[%c0_9, %c0_10] : memref<1x256xf32, #tpu.memory_space<vmem>>, vector<1x256xf32>
    %11 = vector.broadcast %10 : vector<1x256xf32> to vector<128x256xf32>
    %12 = arith.addf %9, %11 : vector<128x256xf32>
    %cst_11 = arith.constant 0.000000e+00 : f32
    %13 = vector.broadcast %cst_11 : f32 to vector<128x256xf32>
    %14 = arith.maximumf %12, %13 : vector<128x256xf32>
    %c0_12 = arith.constant 0 : index
    %c0_13 = arith.constant 0 : index
    %15 = vector.load %arg6[%c0_12, %c0_13] : memref<256x8xf32, #tpu.memory_space<vmem>>, vector<256x8xf32>
    %cst_14 = arith.constant dense<0.000000e+00> : vector<128x8xf32>
    %16 = tpu.matmul %14, %15, %cst_14 {dimension_numbers = #tpu.dot_dimension_numbers<[1], [0], [0], [1], [0, 0, 1, 1], [], []>} : vector<128x256xf32>, vector<256x8xf32>, vector<128x8xf32> -> vector<128x8xf32>
    %c0_15 = arith.constant 0 : index
    %c0_16 = arith.constant 0 : index
    %17 = vector.load %arg7[%c0_15, %c0_16] : memref<1x8xf32, #tpu.memory_space<vmem>>, vector<1x8xf32>
    %18 = vector.broadcast %17 : vector<1x8xf32> to vector<128x8xf32>
    %19 = arith.addf %16, %18 : vector<128x8xf32>
    %cst_17 = arith.constant dense<0xFF800000> : vector<128xf32>
    %20 = vector.multi_reduction <maximumf>, %19, %cst_17 [1] : vector<128x8xf32> to vector<128xf32>
    %21 = vector.shape_cast %20 : vector<128xf32> to vector<128x1xf32>
    %22 = vector.broadcast %21 : vector<128x1xf32> to vector<128x8xf32>
    %23 = arith.subf %19, %22 : vector<128x8xf32>
    %24 = math.exp %23 : vector<128x8xf32>
    %cst_18 = arith.constant dense<0.000000e+00> : vector<128xf32>
    %25 = vector.multi_reduction <add>, %24, %cst_18 [1] : vector<128x8xf32> to vector<128xf32>
    %26 = vector.shape_cast %25 : vector<128xf32> to vector<128x1xf32>
    %27 = tpu.reciprocal %26 {approx = true} : vector<128x1xf32> -> vector<128x1xf32>
    %28 = arith.mulf %26, %27 : vector<128x1xf32>
    %cst_19 = arith.constant 2.000000e+00 : f32
    %29 = vector.broadcast %cst_19 : f32 to vector<128x1xf32>
    %30 = arith.subf %29, %28 : vector<128x1xf32>
    %31 = arith.mulf %27, %30 : vector<128x1xf32>
    %32 = arith.mulf %26, %31 : vector<128x1xf32>
    %cst_20 = arith.constant 2.000000e+00 : f32
    %33 = vector.broadcast %cst_20 : f32 to vector<128x1xf32>
    %34 = arith.subf %33, %32 : vector<128x1xf32>
    %35 = arith.mulf %31, %34 : vector<128x1xf32>
    %36 = vector.broadcast %35 : vector<128x1xf32> to vector<128x8xf32>
    %37 = arith.mulf %24, %36 : vector<128x8xf32>
    %38 = math.log %26 : vector<128x1xf32>
    %39 = vector.broadcast %38 : vector<128x1xf32> to vector<128x8xf32>
    %40 = arith.subf %23, %39 : vector<128x8xf32>
    %41 = tpu.concatenate %37, %40 in 1 : vector<128x8xf32>, vector<128x8xf32> -> vector<128x16xf32>
    %c0_21 = arith.constant 0 : index
    %c0_22 = arith.constant 0 : index
    %42 = vector.load %arg8[%c0_21, %c0_22] : memref<128x16xf32, #tpu.memory_space<vmem>>, vector<128x16xf32>
    tpu.vector_store %arg8[%c0_21, %c0_22], %41 {strides = array<i32>} : memref<128x16xf32, #tpu.memory_space<vmem>>, vector<128x16xf32>,
    return
  }
  func.func @transform_0(%arg0: i32) -> (i32, i32) {
    %c0_i32 = arith.constant 0 : i32
    %c0_i32_0 = arith.constant 0 : i32
    return %arg0, %c0_i32 : i32, i32
  }
  func.func @transform_1(%arg0: i32) -> (i32, i32) {
    %c0_i32 = arith.constant 0 : i32
    %c0_i32_0 = arith.constant 0 : i32
    %c0_i32_1 = arith.constant 0 : i32
    return %c0_i32, %c0_i32_0 : i32, i32
  }
  func.func @transform_2(%arg0: i32) -> (i32, i32) {
    %c0_i32 = arith.constant 0 : i32
    %c0_i32_0 = arith.constant 0 : i32
    %c0_i32_1 = arith.constant 0 : i32
    return %c0_i32, %c0_i32_0 : i32, i32
  }
  func.func @transform_3(%arg0: i32) -> (i32, i32) {
    %c0_i32 = arith.constant 0 : i32
    %c0_i32_0 = arith.constant 0 : i32
    %c0_i32_1 = arith.constant 0 : i32
    return %c0_i32, %c0_i32_0 : i32, i32
  }
  func.func @transform_4(%arg0: i32) -> (i32, i32) {
    %c0_i32 = arith.constant 0 : i32
    %c0_i32_0 = arith.constant 0 : i32
    %c0_i32_1 = arith.constant 0 : i32
    return %c0_i32, %c0_i32_0 : i32, i32
  }
  func.func @transform_5(%arg0: i32) -> (i32, i32) {
    %c0_i32 = arith.constant 0 : i32
    %c0_i32_0 = arith.constant 0 : i32
    %c0_i32_1 = arith.constant 0 : i32
    return %c0_i32, %c0_i32_0 : i32, i32
  }
  func.func @transform_6(%arg0: i32) -> (i32, i32) {
    %c0_i32 = arith.constant 0 : i32
    %c0_i32_0 = arith.constant 0 : i32
    %c0_i32_1 = arith.constant 0 : i32
    return %c0_i32, %c0_i32_0 : i32, i32
  }
  func.func @transform_7(%arg0: i32) -> (i32, i32) {
    %c0_i32 = arith.constant 0 : i32
    %c0_i32_0 = arith.constant 0 : i32
    return %arg0, %c0_i32 : i32, i32
  }
}

</mosaic_0001>

<llo_original>
// kernel: tpu_custom_call.1
$region0: #{tpu_custom_call.1}
  #allocation0 [shape = 'u32[]', space=smem, size = 0x4, offset = 0x4, fixed_abs, tag = 'smem constant byte address 0x4 - core index']
  #allocation1 [shape = 'u32[144,128]{1,0:T(1,128)}', space=vmem, size = 0x12000, scoped, tag = 'internal scratch']
  %s0 = inlined_call_operand.vmem [shape: f32[256,16], index: 0, kind: input, shape index: {}]
  %s1 = inlined_call_operand.vmem [shape: f32[16,256], index: 1, kind: input, shape index: {}]
  %s2 = inlined_call_operand.vmem [shape: f32[1,256], index: 2, kind: input, shape index: {}]
  %s3 = inlined_call_operand.vmem [shape: f32[256,256], index: 3, kind: input, shape index: {}]
  %s4 = inlined_call_operand.vmem [shape: f32[1,256], index: 4, kind: input, shape index: {}]
  %s5 = inlined_call_operand.vmem [shape: f32[256,8], index: 5, kind: input, shape index: {}]
  %s6 = inlined_call_operand.vmem [shape: f32[1,8], index: 6, kind: input, shape index: {}]
  %s7 = inlined_call_operand.vmem [shape: f32[256,16], index: 7, kind: output, shape index: {}]
  %s8 = sld [smem:[#allocation0]]
  $region61: #{tpu_custom_call.1} parent=0
    _
  %s10 = ssub.s32 1, %s8
  %s11 = scalar_select 0, %s10, %s8
  loop: start=0, step=1, limit=4
  $region2: #{tpu_custom_call.1} parent=0 // loop_pre_header
    _
  $region3: #{tpu_custom_call.1} parent=0 // loop_header
    %s13 = sphi 0, %s17
    %p14 = scmp.ge.s32.totalorder %s13, 4
    %s23 = sphi 0, %s25
    %s26 = sphi 0, %s23
    %s27 = sphi 0, %s26
    %s43 = sphi 0, %s27
    %s47 = sphi 0, %s47
    %s49 = sphi 0, %s47
    %s50 = sphi 0, %s49
    %s64 = sphi 0, %s50
    %s68 = sphi 0, %s68
    %s70 = sphi 0, %s68
    %s71 = sphi 0, %s70
    %s85 = sphi 0, %s71
    %s89 = sphi 0, %s89
    %s91 = sphi 0, %s89
    %s92 = sphi 0, %s91
    %s106 = sphi 0, %s92
    %s110 = sphi 0, %s110
    %s112 = sphi 0, %s110
    %s113 = sphi 0, %s112
    %s127 = sphi 0, %s113
    %s131 = sphi 0, %s131
    %s133 = sphi 0, %s131
    %s134 = sphi 0, %s133
    %s148 = sphi 0, %s134
    %s152 = sphi 0, %s152
    %s154 = sphi 0, %s152
    %s155 = sphi 0, %s154
    %s169 = sphi 0, %s155
    %s175 = sphi 0, %s177
    %s178 = sphi 0, %s175
    %s179 = sphi 0, %s178
    %s195 = sphi 0, %s179
  $region4: #{tpu_custom_call.1} parent=0 // loop_header_branch
    %16 = sbr.rel (%p14) target = $region8
  $region5: #{tpu_custom_call.1} parent=0 // loop_body
    %s18 = ssub.s32 %s13, 1
    %s19 = ssub.s32 %s13, 2
    %s20 = sadd.s32 %s13, 1
    %s21 = ssub.s32 %s13, %s20
    %p22 = scmp.eq.s32.totalorder %s21, 0
    %s24 = sadd.s32 %s23, 1
    %s25 = scalar_select %p22, %s23, %s24
    %p28 = pneg %p22
    %p29 = scmp.eq.s32.totalorder %s13, 1
    %p30 = por %p28, %p29
    %p31 = scmp.ne.s32.totalorder %s23, %s26
    %p32 = scmp.eq.s32.totalorder %s13, 0
    %p33 = por %p31, %p32
    %p34 = scmp.ne.s32.totalorder %s23, %s26
    %p35 = scmp.eq.s32.totalorder %s18, 1
    %p36 = por %p34, %p35
    %p37 = scmp.ne.s32.totalorder %s26, %s27
    %p38 = scmp.eq.s32.totalorder %s18, 0
    %p39 = por %p37, %p38
    %p40 = scmp.ne.s32.totalorder %s26, %s27
    %p41 = scmp.eq.s32.totalorder %s19, 1
    %p42 = por %p40, %p41
    %p44 = scmp.ne.s32.totalorder %s27, %s43
    %p45 = scmp.eq.s32.totalorder %s19, 0
    %p46 = por %p44, %p45
    %s48 = sadd.s32 %s47, 1
    %p51 = scmp.eq.s32.totalorder %s13, 1
    %p52 = scmp.ne.s32.totalorder %s47, %s49
    %p53 = scmp.eq.s32.totalorder %s13, 0
    %p54 = por %p52, %p53
    %p55 = scmp.ne.s32.totalorder %s47, %s49
    %p56 = scmp.eq.s32.totalorder %s18, 1
    %p57 = por %p55, %p56
    %p58 = scmp.ne.s32.totalorder %s49, %s50
    %p59 = scmp.eq.s32.totalorder %s18, 0
    %p60 = por %p58, %p59
    %p61 = scmp.ne.s32.totalorder %s49, %s50
    %p62 = scmp.eq.s32.totalorder %s19, 1
    %p63 = por %p61, %p62
    %p65 = scmp.ne.s32.totalorder %s50, %s64
    %p66 = scmp.eq.s32.totalorder %s19, 0
    %p67 = por %p65, %p66
    %s69 = sadd.s32 %s68, 1
    %p72 = scmp.eq.s32.totalorder %s13, 1
    %p73 = scmp.ne.s32.totalorder %s68, %s70
    %p74 = scmp.eq.s32.totalorder %s13, 0
    %p75 = por %p73, %p74
    %p76 = scmp.ne.s32.totalorder %s68, %s70
    %p77 = scmp.eq.s32.totalorder %s18, 1
    %p78 = por %p76, %p77
    %p79 = scmp.ne.s32.totalorder %s70, %s71
    %p80 = scmp.eq.s32.totalorder %s18, 0
    %p81 = por %p79, %p80
    %p82 = scmp.ne.s32.totalorder %s70, %s71
    %p83 = scmp.eq.s32.totalorder %s19, 1
    %p84 = por %p82, %p83
    %p86 = scmp.ne.s32.totalorder %s71, %s85
    %p87 = scmp.eq.s32.totalorder %s19, 0
    %p88 = por %p86, %p87
    %s90 = sadd.s32 %s89, 1
    %p93 = scmp.eq.s32.totalorder %s13, 1
    %p94 = scmp.ne.s32.totalorder %s89, %s91
    %p95 = scmp.eq.s32.totalorder %s13, 0
    %p96 = por %p94, %p95
    %p97 = scmp.ne.s32.totalorder %s89, %s91
    %p98 = scmp.eq.s32.totalorder %s18, 1
    %p99 = por %p97, %p98
    %p100 = scmp.ne.s32.totalorder %s91, %s92
    %p101 = scmp.eq.s32.totalorder %s18, 0
    %p102 = por %p100, %p101
    %p103 = scmp.ne.s32.totalorder %s91, %s92
    %p104 = scmp.eq.s32.totalorder %s19, 1
    %p105 = por %p103, %p104
    %p107 = scmp.ne.s32.totalorder %s92, %s106
    %p108 = scmp.eq.s32.totalorder %s19, 0
    %p109 = por %p107, %p108
    %s111 = sadd.s32 %s110, 1
    %p114 = scmp.eq.s32.totalorder %s13, 1
    %p115 = scmp.ne.s32.totalorder %s110, %s112
    %p116 = scmp.eq.s32.totalorder %s13, 0
    %p117 = por %p115, %p116
    %p118 = scmp.ne.s32.totalorder %s110, %s112
    %p119 = scmp.eq.s32.totalorder %s18, 1
    %p120 = por %p118, %p119
    %p121 = scmp.ne.s32.totalorder %s112, %s113
    %p122 = scmp.eq.s32.totalorder %s18, 0
    %p123 = por %p121, %p122
    %p124 = scmp.ne.s32.totalorder %s112, %s113
    %p125 = scmp.eq.s32.totalorder %s19, 1
    %p126 = por %p124, %p125
    %p128 = scmp.ne.s32.totalorder %s113, %s127
    %p129 = scmp.eq.s32.totalorder %s19, 0
    %p130 = por %p128, %p129
    %s132 = sadd.s32 %s131, 1
    %p135 = scmp.eq.s32.totalorder %s13, 1
    %p136 = scmp.ne.s32.totalorder %s131, %s133
    %p137 = scmp.eq.s32.totalorder %s13, 0
    %p138 = por %p136, %p137
    %p139 = scmp.ne.s32.totalorder %s131, %s133
    %p140 = scmp.eq.s32.totalorder %s18, 1
    %p141 = por %p139, %p140
    %p142 = scmp.ne.s32.totalorder %s133, %s134
    %p143 = scmp.eq.s32.totalorder %s18, 0
    %p144 = por %p142, %p143
    %p145 = scmp.ne.s32.totalorder %s133, %s134
    %p146 = scmp.eq.s32.totalorder %s19, 1
    %p147 = por %p145, %p146
    %p149 = scmp.ne.s32.totalorder %s134, %s148
    %p150 = scmp.eq.s32.totalorder %s19, 0
    %p151 = por %p149, %p150
    %s153 = sadd.s32 %s152, 1
    %p156 = scmp.eq.s32.totalorder %s13, 1
    %p157 = scmp.ne.s32.totalorder %s152, %s154
    %p158 = scmp.eq.s32.totalorder %s13, 0
    %p159 = por %p157, %p158
    %p160 = scmp.ne.s32.totalorder %s152, %s154
    %p161 = scmp.eq.s32.totalorder %s18, 1
    %p162 = por %p160, %p161
    %p163 = scmp.ne.s32.totalorder %s154, %s155
    %p164 = scmp.eq.s32.totalorder %s18, 0
    %p165 = por %p163, %p164
    %p166 = scmp.ne.s32.totalorder %s154, %s155
    %p167 = scmp.eq.s32.totalorder %s19, 1
    %p168 = por %p166, %p167
    %p170 = scmp.ne.s32.totalorder %s155, %s169
    %p171 = scmp.eq.s32.totalorder %s19, 0
    %p172 = por %p170, %p171
    %s173 = ssub.s32 %s13, %s20
    %p174 = scmp.eq.s32.totalorder %s173, 0
    %s176 = sadd.s32 %s175, 1
    %s177 = scalar_select %p174, %s175, %s176
    %p180 = pneg %p174
    %p181 = scmp.eq.s32.totalorder %s13, 1
    %p182 = por %p180, %p181
    %p183 = scmp.ne.s32.totalorder %s175, %s178
    %p184 = scmp.eq.s32.totalorder %s13, 0
    %p185 = por %p183, %p184
    %p186 = scmp.ne.s32.totalorder %s175, %s178
    %p187 = scmp.eq.s32.totalorder %s18, 1
    %p188 = por %p186, %p187
    %p189 = scmp.ne.s32.totalorder %s178, %s179
    %p190 = scmp.eq.s32.totalorder %s18, 0
    %p191 = por %p189, %p190
    %p192 = scmp.ne.s32.totalorder %s178, %s179
    %p193 = scmp.eq.s32.totalorder %s19, 1
    %p194 = por %p192, %p193
    %p196 = scmp.ne.s32.totalorder %s179, %s195
    %p197 = scmp.eq.s32.totalorder %s19, 0
    %p198 = por %p196, %p197
    %p199 = scmp.le.s32.totalorder 1, %s13
    %p200 = scmp.lt.s32.totalorder %s13, 3
    %p201 = pnand %p199, %p200
    %p202 = pneg %p201
    // Predicated region
    $region9: #{tpu_custom_call.1} parent=5 // pred_check
      _
    $region10: #{tpu_custom_call.1} parent=5 // pred_check_branch
      %204 = sbr.rel (%p201) target = $region12
    $region11: #{tpu_custom_call.1} parent=5 // pred_region
      %s205 = ssub.s32 %s13, 1
      // Predicated region
      $region13: #{tpu_custom_call.1} parent=11 // pred_check
        %p206 = pneg %p60
      $region14: #{tpu_custom_call.1} parent=11 // pred_check_branch
        %208 = sbr.rel (%p206) target = $region16
      $region15: #{tpu_custom_call.1} parent=11 // pred_region
        _
      $region16: #{tpu_custom_call.1} parent=11 // pred_fallthru
        _
      // Predicated region
      $region17: #{tpu_custom_call.1} parent=11 // pred_check
        %p209 = pneg %p81
      $region18: #{tpu_custom_call.1} parent=11 // pred_check_branch
        %211 = sbr.rel (%p209) target = $region20
      $region19: #{tpu_custom_call.1} parent=11 // pred_region
        _
      $region20: #{tpu_custom_call.1} parent=11 // pred_fallthru
        _
      // Predicated region
      $region21: #{tpu_custom_call.1} parent=11 // pred_check
        %p212 = pneg %p102
      $region22: #{tpu_custom_call.1} parent=11 // pred_check_branch
        %214 = sbr.rel (%p212) target = $region24
      $region23: #{tpu_custom_call.1} parent=11 // pred_region
        _
      $region24: #{tpu_custom_call.1} parent=11 // pred_fallthru
        _
      // Predicated region
      $region25: #{tpu_custom_call.1} parent=11 // pred_check
        %p215 = pneg %p123
      $region26: #{tpu_custom_call.1} parent=11 // pred_check_branch
        %217 = sbr.rel (%p215) target = $region28
      $region27: #{tpu_custom_call.1} parent=11 // pred_region
        _
      $region28: #{tpu_custom_call.1} parent=11 // pred_fallthru
        _
      // Predicated region
      $region29: #{tpu_custom_call.1} parent=11 // pred_check
        %p218 = pneg %p144
      $region30: #{tpu_custom_call.1} parent=11 // pred_check_branch
        %220 = sbr.rel (%p218) target = $region32
      $region31: #{tpu_custom_call.1} parent=11 // pred_region
        _
      $region32: #{tpu_custom_call.1} parent=11 // pred_fallthru
        _
      // Predicated region
      $region33: #{tpu_custom_call.1} parent=11 // pred_check
        %p221 = pneg %p165
      $region34: #{tpu_custom_call.1} parent=11 // pred_check_branch
        %223 = sbr.rel (%p221) target = $region36
      $region35: #{tpu_custom_call.1} parent=11 // pred_region
        _
      $region36: #{tpu_custom_call.1} parent=11 // pred_fallthru
        _
    $region12: #{tpu_custom_call.1} parent=5 // pred_fallthru
      _
    %p224 = scmp.lt.s32.totalorder %s13, 2
    // Predicated region
    $region37: #{tpu_custom_call.1} parent=5 // pred_check
      %p225 = pneg %p224
    $region38: #{tpu_custom_call.1} parent=5 // pred_check_branch
      %227 = sbr.rel (%p225) target = $region40
    $region39: #{tpu_custom_call.1} parent=5 // pred_region
      // Predicated region
      $region41: #{tpu_custom_call.1} parent=39 // pred_check
        %p228 = pneg %p33
      $region42: #{tpu_custom_call.1} parent=39 // pred_check_branch
        %230 = sbr.rel (%p228) target = $region44
      $region43: #{tpu_custom_call.1} parent=39 // pred_region
        %s231 = smul.u32 16, %s13
        %p232 = scmp.lt.s32.totalorder %s231, 31
        %s233 = scalar_select %p232, %s231, 31
        %s234 = smul.addr %s233, 8
        %s235 = scalar_lea.vmem %s0, %s234
        %s236 = smul.u32 16, %s13
      $region44: #{tpu_custom_call.1} parent=39 // pred_fallthru
        _
    $region40: #{tpu_custom_call.1} parent=5 // pred_fallthru
      _
    %p237 = scmp.le.s32.totalorder 1, %s13
    %p238 = scmp.lt.s32.totalorder %s13, 3
    %p239 = pnand %p237, %p238
    %p240 = pneg %p239
    // Predicated region
    $region45: #{tpu_custom_call.1} parent=5 // pred_check
      _
    $region46: #{tpu_custom_call.1} parent=5 // pred_check_branch
      %242 = sbr.rel (%p239) target = $region48
    $region47: #{tpu_custom_call.1} parent=5 // pred_region
      %s243 = ssub.s32 %s13, 1
      %s244 = smul.u32 16, %s18
      %p245 = scmp.lt.s32.totalorder %s244, 31
      %s246 = scalar_select %p245, %s244, 31
      %s247 = smul.addr %s246, 8
      %s248 = scalar_lea.vmem %s0, %s247
      %p249 = pneg %p39
      %p250 = pneg %p36
      %p251 = pneg %p60
      %p252 = pneg %p57
      %p253 = pneg %p81
      %p254 = pneg %p78
      %p255 = pneg %p102
      %p256 = pneg %p99
      %p257 = pneg %p123
      %p258 = pneg %p120
      %p259 = pneg %p144
      %p260 = pneg %p141
      %p261 = pneg %p165
      %p262 = pneg %p162
      %p263 = pneg %p191
      %p264 = pneg %p188
      %s265 = smul.u32 16, %s18
      %p266 = scmp.lt.s32.totalorder %s265, 31
      %s267 = scalar_select %p266, %s265, 31
      %s268 = smul.addr %s267, 8
      %s269 = scalar_lea.vmem %s7, %s268
      %s270 = smul.u32 16, %s18
      %p271 = scmp.lt.s32.totalorder %s270, 31
      %s272 = scalar_select %p271, %s270, 31
      %s273 = smul.addr %s272, 8
      %s274 = scalar_lea.vmem %s0, %s273
      %s275 = smul.u32 16, %s18
      %s276 = smul.u32 16, %s18
      %p277 = scmp.lt.s32.totalorder %s276, 31
      %s278 = scalar_select %p277, %s276, 31
      %s279 = smul.addr %s278, 8
      %s280 = scalar_lea.vmem %s7, %s279
      %s281 = smul.u32 16, %s18
      %v282 = vld [vmem:[%s274] sm:$0xff]
      %v283 = vld [vmem:[%s274 + $0x8] sm:$0xff]
      %v284 = vld [vmem:[%s274 + $0x10] sm:$0xff]
      %v285 = vld [vmem:[%s274 + $0x18] sm:$0xff]
      %v286 = vld [vmem:[%s274 + $0x20] sm:$0xff]
      %v287 = vld [vmem:[%s274 + $0x28] sm:$0xff]
      %v288 = vld [vmem:[%s274 + $0x30] sm:$0xff]
      %v289 = vld [vmem:[%s274 + $0x38] sm:$0xff]
      %v290 = vld [vmem:[%s274 + $0x40] sm:$0xff]
      %v291 = vld [vmem:[%s274 + $0x48] sm:$0xff]
      %v292 = vld [vmem:[%s274 + $0x50] sm:$0xff]
      %v293 = vld [vmem:[%s274 + $0x58] sm:$0xff]
      %v294 = vld [vmem:[%s274 + $0x60] sm:$0xff]
      %v295 = vld [vmem:[%s274 + $0x68] sm:$0xff]
      %v296 = vld [vmem:[%s274 + $0x70] sm:$0xff]
      %v297 = vld [vmem:[%s274 + $0x78] sm:$0xff]
      %v298 = vld [vmem:[%s1] sm:$0xff]
      %v299 = vld [vmem:[%s1 + $0x8] sm:$0xff]
      %v300 = vld [vmem:[%s1 + $0x10] sm:$0xff]
      %v301 = vld [vmem:[%s1 + $0x18] sm:$0xff]
      %v302 = vld [vmem:[%s2] sm:$0x3]
      %v304 = vlaneseq
      %v305 = vshrl.u32 %v304, 7
      %v306 = vsub.s32 0, %v305
      %v307 = vrot.slane %v302, %v306
      %v308 = vlaneseq
      %v309 = vshrl.u32 %v308, 7
      %v310 = vsub.s32 1, %v309
      %v311 = vrot.slane %v302, %v310
      %vm314 = vcmask 130048
      %v316 = vsel %vm314, %v282, 0
      %v319 = vsel %vm314, %v283, 0
      %v322 = vsel %vm314, %v284, 0
      %v325 = vsel %vm314, %v285, 0
      %v328 = vsel %vm314, %v286, 0
      %v331 = vsel %vm314, %v287, 0
      %v334 = vsel %vm314, %v288, 0
      %v337 = vsel %vm314, %v289, 0
      %v340 = vsel %vm314, %v290, 0
      %v343 = vsel %vm314, %v291, 0
      %v346 = vsel %vm314, %v292, 0
      %v349 = vsel %vm314, %v293, 0
      %v352 = vsel %vm314, %v294, 0
      %v355 = vsel %vm314, %v295, 0
      %v358 = vsel %vm314, %v296, 0
      %v361 = vsel %vm314, %v297, 0
      %363 = vmatprep.subr.mxu0 %v299
      %364 = vmatpush1.msra.mxu0 %v298
      %365 = vmatprep.subr.mxu0 %v301
      %366 = vmatpush1.msra.mxu0 %v300
      %367 = vmatprep.subr.mxu0 0.0
      %368 = vmatpush1.msra.mxu0 0.0
      %369 = vmatprep.subr.mxu0 0.0
      %370 = vmatpush1.msra.mxu0 0.0
      %371 = vmatprep.subr.mxu0 0.0
      %372 = vmatpush1.msra.mxu0 0.0
      %373 = vmatprep.subr.mxu0 0.0
      %374 = vmatpush1.msra.mxu0 0.0
      %375 = vmatprep.subr.mxu0 0.0
      %376 = vmatpush1.msra.mxu0 0.0
      %377 = vmatprep.subr.mxu0 0.0
      %378 = vmatpush1.msra.mxu0 0.0
      %379 = vmatprep.subr.mxu0 0.0
      %380 = vmatpush1.msra.mxu0 0.0
      %381 = vmatprep.subr.mxu0 0.0
      %382 = vmatpush1.msra.mxu0 0.0
      %383 = vmatprep.subr.mxu0 0.0
      %384 = vmatpush1.msra.mxu0 0.0
      %385 = vmatprep.subr.mxu0 0.0
      %386 = vmatpush1.msra.mxu0 0.0
      %387 = vmatprep.subr.mxu0 0.0
      %388 = vmatpush1.msra.mxu0 0.0
      %389 = vmatprep.subr.mxu0 0.0
      %390 = vmatpush1.msra.mxu0 0.0
      %391 = vmatprep.subr.mxu0 0.0
      %392 = vmatpush1.msra.mxu0 0.0
      %393 = vmatprep.subr.mxu0 0.0
      %394 = vmatpush1.msra.mxu0 0.0
      %395 = vmatprep.subr.mxu0 0.0
      %396 = vmatpush1.msra.mxu0 0.0
      %397 = vmatprep.subr.mxu0 0.0
      %398 = vmatpush1.msra.mxu0 0.0
      %399 = vmatprep.subr.mxu0 0.0
      %400 = vmatpush1.msra.mxu0 0.0
      %401 = vmatprep.subr.mxu0 0.0
      %402 = vmatpush1.msra.mxu0 0.0
      %403 = vmatprep.subr.mxu0 0.0
      %404 = vmatpush1.msra.mxu0 0.0
      %405 = vmatprep.subr.mxu0 0.0
      %406 = vmatpush1.msra.mxu0 0.0
      %407 = vmatprep.subr.mxu0 0.0
      %408 = vmatpush1.msra.mxu0 0.0
      %409 = vmatprep.subr.mxu0 0.0
      %410 = vmatpush1.msra.mxu0 0.0
      %411 = vmatprep.subr.mxu0 0.0
      %412 = vmatpush1.msra.mxu0 0.0
      %413 = vmatprep.subr.mxu0 0.0
      %414 = vmatpush1.msra.mxu0 0.0
      %415 = vmatprep.subr.mxu0 0.0
      %416 = vmatpush1.msra.mxu0 0.0
      %417 = vmatprep.subr.mxu0 0.0
      %418 = vmatpush1.msra.mxu0 0.0
      %419 = vmatprep.subr.mxu0 0.0
      %420 = vmatpush1.msra.mxu0 0.0
      %421 = vmatprep.subr.mxu0 0.0
      %422 = vmatpush1.msra.mxu0 0.0
      %423 = vmatprep.subr.mxu0 0.0
      %424 = vmatpush1.msra.mxu0 0.0
      %425 = vmatprep.subr.mxu0 0.0
      %426 = vmatpush1.msra.mxu0 0.0
      %427 = vmatprep.mubr.f32.mxu0 0.0
      %428 = vmatmul.mubr.f32.gmra.mrb[0].mxu0 %v316
      %v429 = vpop.f32.mrb[0].mxu0
      %v430 = vadd.f32 %v307, %v429
      %v431 = vpop.f32.mrb[0].mxu0
      %v432 = vadd.f32 %v311, %v431
      %433 = vmatprep.mubr.f32.mxu0 0.0
      %434 = vmatmul.mubr.f32.gmra.mrb[0].mxu0 %v319
      %v435 = vpop.f32.mrb[0].mxu0
      %v436 = vadd.f32 %v307, %v435
      %v437 = vpop.f32.mrb[0].mxu0
      %v438 = vadd.f32 %v311, %v437
      %439 = vmatprep.mubr.f32.mxu0 0.0
      %440 = vmatmul.mubr.f32.gmra.mrb[0].mxu0 %v322
      %v441 = vpop.f32.mrb[0].mxu0
      %v442 = vadd.f32 %v307, %v441
      %v443 = vpop.f32.mrb[0].mxu0
      %v444 = vadd.f32 %v311, %v443
      %445 = vmatprep.mubr.f32.mxu0 0.0
      %446 = vmatmul.mubr.f32.gmra.mrb[0].mxu0 %v325
      %v447 = vpop.f32.mrb[0].mxu0
      %v448 = vadd.f32 %v307, %v447
      %v449 = vpop.f32.mrb[0].mxu0
      %v450 = vadd.f32 %v311, %v449
      %451 = vmatprep.mubr.f32.mxu0 0.0
      %452 = vmatmul.mubr.f32.gmra.mrb[0].mxu0 %v328
      %v453 = vpop.f32.mrb[0].mxu0
      %v454 = vadd.f32 %v307, %v453
      %v455 = vpop.f32.mrb[0].mxu0
      %v456 = vadd.f32 %v311, %v455
      %457 = vmatprep.mubr.f32.mxu0 0.0
      %458 = vmatmul.mubr.f32.gmra.mrb[0].mxu0 %v331
      %v459 = vpop.f32.mrb[0].mxu0
      %v460 = vadd.f32 %v307, %v459
      %v461 = vpop.f32.mrb[0].mxu0
      %v462 = vadd.f32 %v311, %v461
      %463 = vmatprep.mubr.f32.mxu0 0.0
      %464 = vmatmul.mubr.f32.gmra.mrb[0].mxu0 %v334
      %v465 = vpop.f32.mrb[0].mxu0
      %v466 = vadd.f32 %v307, %v465
      %v467 = vpop.f32.mrb[0].mxu0
      %v468 = vadd.f32 %v311, %v467
      %469 = vmatprep.mubr.f32.mxu0 0.0
      %470 = vmatmul.mubr.f32.gmra.mrb[0].mxu0 %v337
      %v471 = vpop.f32.mrb[0].mxu0
      %v472 = vadd.f32 %v307, %v471
      %v473 = vpop.f32.mrb[0].mxu0
      %v474 = vadd.f32 %v311, %v473
      %475 = vmatprep.mubr.f32.mxu0 0.0
      %476 = vmatmul.mubr.f32.gmra.mrb[0].mxu0 %v340
      %v477 = vpop.f32.mrb[0].mxu0
      %v478 = vadd.f32 %v307, %v477
      %v479 = vpop.f32.mrb[0].mxu0
      %v480 = vadd.f32 %v311, %v479
      %481 = vmatprep.mubr.f32.mxu0 0.0
      %482 = vmatmul.mubr.f32.gmra.mrb[0].mxu0 %v343
      %v483 = vpop.f32.mrb[0].mxu0
      %v484 = vadd.f32 %v307, %v483
      %v485 = vpop.f32.mrb[0].mxu0
      %v486 = vadd.f32 %v311, %v485
      %487 = vmatprep.mubr.f32.mxu0 0.0
      %488 = vmatmul.mubr.f32.gmra.mrb[0].mxu0 %v346
      %v489 = vpop.f32.mrb[0].mxu0
      %v490 = vadd.f32 %v307, %v489
      %v491 = vpop.f32.mrb[0].mxu0
      %v492 = vadd.f32 %v311, %v491
      %493 = vmatprep.mubr.f32.mxu0 0.0
      %494 = vmatmul.mubr.f32.gmra.mrb[0].mxu0 %v349
      %v495 = vpop.f32.mrb[0].mxu0
      %v496 = vadd.f32 %v307, %v495
      %v497 = vpop.f32.mrb[0].mxu0
      %v498 = vadd.f32 %v311, %v497
      %499 = vmatprep.mubr.f32.mxu0 0.0
      %500 = vmatmul.mubr.f32.gmra.mrb[0].mxu0 %v352
      %v501 = vpop.f32.mrb[0].mxu0
      %v502 = vadd.f32 %v307, %v501
      %v503 = vpop.f32.mrb[0].mxu0
      %v504 = vadd.f32 %v311, %v503
      %505 = vmatprep.mubr.f32.mxu0 0.0
      %506 = vmatmul.mubr.f32.gmra.mrb[0].mxu0 %v355
      %v507 = vpop.f32.mrb[0].mxu0
      %v508 = vadd.f32 %v307, %v507
      %v509 = vpop.f32.mrb[0].mxu0
      %v510 = vadd.f32 %v311, %v509
      %511 = vmatprep.mubr.f32.mxu0 0.0
      %512 = vmatmul.mubr.f32.gmra.mrb[0].mxu0 %v358
      %v513 = vpop.f32.mrb[0].mxu0
      %v514 = vadd.f32 %v307, %v513
      %v515 = vpop.f32.mrb[0].mxu0
      %v516 = vadd.f32 %v311, %v515
      %517 = vmatprep.mubr.f32.mxu0 0.0
      %518 = vmatmul.mubr.f32.gmra.mrb[0].mxu0 %v361
      %v519 = vpop.f32.mrb[0].mxu0
      %v520 = vadd.f32 %v307, %v519
      %v521 = vpop.f32.mrb[0].mxu0
      %v522 = vadd.f32 %v311, %v521
      %523 = vdwg.mxu0
      %v524 = vmax.f32 %v430, 0.0
      %v525 = vmax.f32 %v432, 0.0
      %v526 = vmax.f32 %v436, 0.0
      %v527 = vmax.f32 %v438, 0.0
      %v528 = vmax.f32 %v442, 0.0
      %v529 = vmax.f32 %v444, 0.0
      %v530 = vmax.f32 %v448, 0.0
      %v531 = vmax.f32 %v450, 0.0
      %v532 = vmax.f32 %v454, 0.0
      %v533 = vmax.f32 %v456, 0.0
      %v534 = vmax.f32 %v460, 0.0
      %v535 = vmax.f32 %v462, 0.0
      %v536 = vmax.f32 %v466, 0.0
      %v537 = vmax.f32 %v468, 0.0
      %v538 = vmax.f32 %v472, 0.0
      %v539 = vmax.f32 %v474, 0.0
      %v540 = vmax.f32 %v478, 0.0
      %v541 = vmax.f32 %v480, 0.0
      %v542 = vmax.f32 %v484, 0.0
      %v543 = vmax.f32 %v486, 0.0
      %v544 = vmax.f32 %v490, 0.0
      %v545 = vmax.f32 %v492, 0.0
      %v546 = vmax.f32 %v496, 0.0
      %v547 = vmax.f32 %v498, 0.0
      %v548 = vmax.f32 %v502, 0.0
      %v549 = vmax.f32 %v504, 0.0
      %v550 = vmax.f32 %v508, 0.0
      %v551 = vmax.f32 %v510, 0.0
      %v552 = vmax.f32 %v514, 0.0
      %v553 = vmax.f32 %v516, 0.0
      %v554 = vmax.f32 %v520, 0.0
      %v555 = vmax.f32 %v522, 0.0
      %v556 = vld [vmem:[%s3] sm:$0xff]
      %v557 = vld [vmem:[%s3 + $0x8] sm:$0xff]
      %v558 = vld [vmem:[%s3 + $0x10] sm:$0xff]
      %v559 = vld [vmem:[%s3 + $0x18] sm:$0xff]
      %v560 = vld [vmem:[%s3 + $0x20] sm:$0xff]
      %v561 = vld [vmem:[%s3 + $0x28] sm:$0xff]
      %v562 = vld [vmem:[%s3 + $0x30] sm:$0xff]
      %v563 = vld [vmem:[%s3 + $0x38] sm:$0xff]
      %v564 = vld [vmem:[%s3 + $0x40] sm:$0xff]
      %v565 = vld [vmem:[%s3 + $0x48] sm:$0xff]
      %v566 = vld [vmem:[%s3 + $0x50] sm:$0xff]
      %v567 = vld [vmem:[%s3 + $0x58] sm:$0xff]
      %v568 = vld [vmem:[%s3 + $0x60] sm:$0xff]
      %v569 = vld [vmem:[%s3 + $0x68] sm:$0xff]
      %v570 = vld [vmem:[%s3 + $0x70] sm:$0xff]
      %v571 = vld [vmem:[%s3 + $0x78] sm:$0xff]
      %v572 = vld [vmem:[%s3 + $0x80] sm:$0xff]
      %v573 = vld [vmem:[%s3 + $0x88] sm:$0xff]
      %v574 = vld [vmem:[%s3 + $0x90] sm:$0xff]
      %v575 = vld [vmem:[%s3 + $0x98] sm:$0xff]
      %v576 = vld [vmem:[%s3 + $0xa0] sm:$0xff]
      %v577 = vld [vmem:[%s3 + $0xa8] sm:$0xff]
      %v578 = vld [vmem:[%s3 + $0xb0] sm:$0xff]
      %v579 = vld [vmem:[%s3 + $0xb8] sm:$0xff]
      %v580 = vld [vmem:[%s3 + $0xc0] sm:$0xff]
      %v581 = vld [vmem:[%s3 + $0xc8] sm:$0xff]
      %v582 = vld [vmem:[%s3 + $0xd0] sm:$0xff]
      %v583 = vld [vmem:[%s3 + $0xd8] sm:$0xff]
      %v584 = vld [vmem:[%s3 + $0xe0] sm:$0xff]
      %v585 = vld [vmem:[%s3 + $0xe8] sm:$0xff]
      %v586 = vld [vmem:[%s3 + $0xf0] sm:$0xff]
      %v587 = vld [vmem:[%s3 + $0xf8] sm:$0xff]
      %v588 = vld [vmem:[%s3 + $0x100] sm:$0xff]
      %v589 = vld [vmem:[%s3 + $0x108] sm:$0xff]
      %v590 = vld [vmem:[%s3 + $0x110] sm:$0xff]
      %v591 = vld [vmem:[%s3 + $0x118] sm:$0xff]
      %v592 = vld [vmem:[%s3 + $0x120] sm:$0xff]
      %v593 = vld [vmem:[%s3 + $0x128] sm:$0xff]
      %v594 = vld [vmem:[%s3 + $0x130] sm:$0xff]
      %v595 = vld [vmem:[%s3 + $0x138] sm:$0xff]
      %v596 = vld [vmem:[%s3 + $0x140] sm:$0xff]
      %v597 = vld [vmem:[%s3 + $0x148] sm:$0xff]
      %v598 = vld [vmem:[%s3 + $0x150] sm:$0xff]
      %v599 = vld [vmem:[%s3 + $0x158] sm:$0xff]
      %v600 = vld [vmem:[%s3 + $0x160] sm:$0xff]
      %v601 = vld [vmem:[%s3 + $0x168] sm:$0xff]
      %v602 = vld [vmem:[%s3 + $0x170] sm:$0xff]
      %v603 = vld [vmem:[%s3 + $0x178] sm:$0xff]
      %v604 = vld [vmem:[%s3 + $0x180] sm:$0xff]
      %v605 = vld [vmem:[%s3 + $0x188] sm:$0xff]
      %v606 = vld [vmem:[%s3 + $0x190] sm:$0xff]
      %v607 = vld [vmem:[%s3 + $0x198] sm:$0xff]
      %v608 = vld [vmem:[%s3 + $0x1a0] sm:$0xff]
      %v609 = vld [vmem:[%s3 + $0x1a8] sm:$0xff]
      %v610 = vld [vmem:[%s3 + $0x1b0] sm:$0xff]
      %v611 = vld [vmem:[%s3 + $0x1b8] sm:$0xff]
      %v612 = vld [vmem:[%s3 + $0x1c0] sm:$0xff]
      %v613 = vld [vmem:[%s3 + $0x1c8] sm:$0xff]
      %v614 = vld [vmem:[%s3 + $0x1d0] sm:$0xff]
      %v615 = vld [vmem:[%s3 + $0x1d8] sm:$0xff]
      %v616 = vld [vmem:[%s3 + $0x1e0] sm:$0xff]
      %v617 = vld [vmem:[%s3 + $0x1e8] sm:$0xff]
      %v618 = vld [vmem:[%s3 + $0x1f0] sm:$0xff]
      %v619 = vld [vmem:[%s3 + $0x1f8] sm:$0xff]
      %v620 = vld [vmem:[%s4] sm:$0x3]
      %v622 = vlaneseq
      %v623 = vshrl.u32 %v622, 7
      %v624 = vsub.s32 0, %v623
      %v625 = vrot.slane %v620, %v624
      %v626 = vlaneseq
      %v627 = vshrl.u32 %v626, 7
      %v628 = vsub.s32 1, %v627
      %v629 = vrot.slane %v620, %v628
      %632 = vmatprep.subr.mxu0 %v557
      %633 = vmatpush1.msra.mxu0 %v556
      %634 = vmatprep.subr.mxu0 %v559
      %635 = vmatpush1.msra.mxu0 %v558
      %636 = vmatprep.subr.mxu0 %v561
      %637 = vmatpush1.msra.mxu0 %v560
      %638 = vmatprep.subr.mxu0 %v563
      %639 = vmatpush1.msra.mxu0 %v562
      %640 = vmatprep.subr.mxu0 %v565
      %641 = vmatpush1.msra.mxu0 %v564
      %642 = vmatprep.subr.mxu0 %v567
      %643 = vmatpush1.msra.mxu0 %v566
      %644 = vmatprep.subr.mxu0 %v569
      %645 = vmatpush1.msra.mxu0 %v568
      %646 = vmatprep.subr.mxu0 %v571
      %647 = vmatpush1.msra.mxu0 %v570
      %648 = vmatprep.subr.mxu0 %v573
      %649 = vmatpush1.msra.mxu0 %v572
      %650 = vmatprep.subr.mxu0 %v575
      %651 = vmatpush1.msra.mxu0 %v574
      %652 = vmatprep.subr.mxu0 %v577
      %653 = vmatpush1.msra.mxu0 %v576
      %654 = vmatprep.subr.mxu0 %v579
      %655 = vmatpush1.msra.mxu0 %v578
      %656 = vmatprep.subr.mxu0 %v581
      %657 = vmatpush1.msra.mxu0 %v580
      %658 = vmatprep.subr.mxu0 %v583
      %659 = vmatpush1.msra.mxu0 %v582
      %660 = vmatprep.subr.mxu0 %v585
      %661 = vmatpush1.msra.mxu0 %v584
      %662 = vmatprep.subr.mxu0 %v587
      %663 = vmatpush1.msra.mxu0 %v586
      %664 = vmatprep.subr.mxu0 %v589
      %665 = vmatpush1.msra.mxu0 %v588
      %666 = vmatprep.subr.mxu0 %v591
      %667 = vmatpush1.msra.mxu0 %v590
      %668 = vmatprep.subr.mxu0 %v593
      %669 = vmatpush1.msra.mxu0 %v592
      %670 = vmatprep.subr.mxu0 %v595
      %671 = vmatpush1.msra.mxu0 %v594
      %672 = vmatprep.subr.mxu0 %v597
      %673 = vmatpush1.msra.mxu0 %v596
      %674 = vmatprep.subr.mxu0 %v599
      %675 = vmatpush1.msra.mxu0 %v598
      %676 = vmatprep.subr.mxu0 %v601
      %677 = vmatpush1.msra.mxu0 %v600
      %678 = vmatprep.subr.mxu0 %v603
      %679 = vmatpush1.msra.mxu0 %v602
      %680 = vmatprep.subr.mxu0 %v605
      %681 = vmatpush1.msra.mxu0 %v604
      %682 = vmatprep.subr.mxu0 %v607
      %683 = vmatpush1.msra.mxu0 %v606
      %684 = vmatprep.subr.mxu0 %v609
      %685 = vmatpush1.msra.mxu0 %v608
      %686 = vmatprep.subr.mxu0 %v611
      %687 = vmatpush1.msra.mxu0 %v610
      %688 = vmatprep.subr.mxu0 %v613
      %689 = vmatpush1.msra.mxu0 %v612
      %690 = vmatprep.subr.mxu0 %v615
      %691 = vmatpush1.msra.mxu0 %v614
      %692 = vmatprep.subr.mxu0 %v617
      %693 = vmatpush1.msra.mxu0 %v616
      %694 = vmatprep.subr.mxu0 %v619
      %695 = vmatpush1.msra.mxu0 %v618
      %696 = vmatprep.mubr.f32.mxu0 %v525
      %697 = vmatmul.mubr.f32.gmra.mrb[0].mxu0 %v524
      %v698 = vpop.f32.mrb[0].mxu0
      %v699 = vadd.f32 %v625, %v698
      %v700 = vpop.f32.mrb[0].mxu0
      %v701 = vadd.f32 %v629, %v700
      %702 = vmatprep.mubr.f32.mxu0 %v527
      %703 = vmatmul.mubr.f32.gmra.mrb[0].mxu0 %v526
      %v704 = vpop.f32.mrb[0].mxu0
      %v705 = vadd.f32 %v625, %v704
      %v706 = vpop.f32.mrb[0].mxu0
      %v707 = vadd.f32 %v629, %v706
      %708 = vmatprep.mubr.f32.mxu0 %v529
      %709 = vmatmul.mubr.f32.gmra.mrb[0].mxu0 %v528
      %v710 = vpop.f32.mrb[0].mxu0
      %v711 = vadd.f32 %v625, %v710
      %v712 = vpop.f32.mrb[0].mxu0
      %v713 = vadd.f32 %v629, %v712
      %714 = vmatprep.mubr.f32.mxu0 %v531
      %715 = vmatmul.mubr.f32.gmra.mrb[0].mxu0 %v530
      %v716 = vpop.f32.mrb[0].mxu0
      %v717 = vadd.f32 %v625, %v716
      %v718 = vpop.f32.mrb[0].mxu0
      %v719 = vadd.f32 %v629, %v718
      %720 = vmatprep.mubr.f32.mxu0 %v533
      %721 = vmatmul.mubr.f32.gmra.mrb[0].mxu0 %v532
      %v722 = vpop.f32.mrb[0].mxu0
      %v723 = vadd.f32 %v625, %v722
      %v724 = vpop.f32.mrb[0].mxu0
      %v725 = vadd.f32 %v629, %v724
      %726 = vmatprep.mubr.f32.mxu0 %v535
      %727 = vmatmul.mubr.f32.gmra.mrb[0].mxu0 %v534
      %v728 = vpop.f32.mrb[0].mxu0
      %v729 = vadd.f32 %v625, %v728
      %v730 = vpop.f32.mrb[0].mxu0
      %v731 = vadd.f32 %v629, %v730
      %732 = vmatprep.mubr.f32.mxu0 %v537
      %733 = vmatmul.mubr.f32.gmra.mrb[0].mxu0 %v536
      %v734 = vpop.f32.mrb[0].mxu0
      %v735 = vadd.f32 %v625, %v734
      %v736 = vpop.f32.mrb[0].mxu0
      %v737 = vadd.f32 %v629, %v736
      %738 = vmatprep.mubr.f32.mxu0 %v539
      %739 = vmatmul.mubr.f32.gmra.mrb[0].mxu0 %v538
      %v740 = vpop.f32.mrb[0].mxu0
      %v741 = vadd.f32 %v625, %v740
      %v742 = vpop.f32.mrb[0].mxu0
      %v743 = vadd.f32 %v629, %v742
      %744 = vmatprep.mubr.f32.mxu0 %v541
      %745 = vmatmul.mubr.f32.gmra.mrb[0].mxu0 %v540
      %v746 = vpop.f32.mrb[0].mxu0
      %v747 = vadd.f32 %v625, %v746
      %v748 = vpop.f32.mrb[0].mxu0
      %v749 = vadd.f32 %v629, %v748
      %750 = vmatprep.mubr.f32.mxu0 %v543
      %751 = vmatmul.mubr.f32.gmra.mrb[0].mxu0 %v542
      %v752 = vpop.f32.mrb[0].mxu0
      %v753 = vadd.f32 %v625, %v752
      %v754 = vpop.f32.mrb[0].mxu0
      %v755 = vadd.f32 %v629, %v754
      %756 = vmatprep.mubr.f32.mxu0 %v545
      %757 = vmatmul.mubr.f32.gmra.mrb[0].mxu0 %v544
      %v758 = vpop.f32.mrb[0].mxu0
      %v759 = vadd.f32 %v625, %v758
      %v760 = vpop.f32.mrb[0].mxu0
      %v761 = vadd.f32 %v629, %v760
      %762 = vmatprep.mubr.f32.mxu0 %v547
      %763 = vmatmul.mubr.f32.gmra.mrb[0].mxu0 %v546
      %v764 = vpop.f32.mrb[0].mxu0
      %v765 = vadd.f32 %v625, %v764
      %v766 = vpop.f32.mrb[0].mxu0
      %v767 = vadd.f32 %v629, %v766
      %768 = vmatprep.mubr.f32.mxu0 %v549
      %769 = vmatmul.mubr.f32.gmra.mrb[0].mxu0 %v548
      %v770 = vpop.f32.mrb[0].mxu0
      %v771 = vadd.f32 %v625, %v770
      %v772 = vpop.f32.mrb[0].mxu0
      %v773 = vadd.f32 %v629, %v772
      %774 = vmatprep.mubr.f32.mxu0 %v551
      %775 = vmatmul.mubr.f32.gmra.mrb[0].mxu0 %v550
      %v776 = vpop.f32.mrb[0].mxu0
      %v777 = vadd.f32 %v625, %v776
      %v778 = vpop.f32.mrb[0].mxu0
      %v779 = vadd.f32 %v629, %v778
      %780 = vmatprep.mubr.f32.mxu0 %v553
      %781 = vmatmul.mubr.f32.gmra.mrb[0].mxu0 %v552
      %v782 = vpop.f32.mrb[0].mxu0
      %v783 = vadd.f32 %v625, %v782
      %v784 = vpop.f32.mrb[0].mxu0
      %v785 = vadd.f32 %v629, %v784
      %786 = vmatprep.mubr.f32.mxu0 %v555
      %787 = vmatmul.mubr.f32.gmra.mrb[0].mxu0 %v554
      %v788 = vpop.f32.mrb[0].mxu0
      %v789 = vadd.f32 %v625, %v788
      %v790 = vpop.f32.mrb[0].mxu0
      %v791 = vadd.f32 %v629, %v790
      %792 = vdwg.mxu0
      %v793 = vmax.f32 %v699, 0.0
      %v794 = vmax.f32 %v701, 0.0
      %v795 = vmax.f32 %v705, 0.0
      %v796 = vmax.f32 %v707, 0.0
      %v797 = vmax.f32 %v711, 0.0
      %v798 = vmax.f32 %v713, 0.0
      %v799 = vmax.f32 %v717, 0.0
      %v800 = vmax.f32 %v719, 0.0
      %v801 = vmax.f32 %v723, 0.0
      %v802 = vmax.f32 %v725, 0.0
      %v803 = vmax.f32 %v729, 0.0
      %v804 = vmax.f32 %v731, 0.0
      %v805 = vmax.f32 %v735, 0.0
      %v806 = vmax.f32 %v737, 0.0
      %v807 = vmax.f32 %v741, 0.0
      %v808 = vmax.f32 %v743, 0.0
      %v809 = vmax.f32 %v747, 0.0
      %v810 = vmax.f32 %v749, 0.0
      %v811 = vmax.f32 %v753, 0.0
      %v812 = vmax.f32 %v755, 0.0
      %v813 = vmax.f32 %v759, 0.0
      %v814 = vmax.f32 %v761, 0.0
      %v815 = vmax.f32 %v765, 0.0
      %v816 = vmax.f32 %v767, 0.0
      %v817 = vmax.f32 %v771, 0.0
      %v818 = vmax.f32 %v773, 0.0
      %v819 = vmax.f32 %v777, 0.0
      %v820 = vmax.f32 %v779, 0.0
      %v821 = vmax.f32 %v783, 0.0
      %v822 = vmax.f32 %v785, 0.0
      %v823 = vmax.f32 %v789, 0.0
      %v824 = vmax.f32 %v791, 0.0
      %v825 = vld [vmem:[%s5] sm:$0xff]
      %v826 = vld [vmem:[%s5 + $0x8] sm:$0xff]
      %v827 = vld [vmem:[%s5 + $0x10] sm:$0xff]
      %v828 = vld [vmem:[%s5 + $0x18] sm:$0xff]
      %v829 = vld [vmem:[%s5 + $0x20] sm:$0xff]
      %v830 = vld [vmem:[%s5 + $0x28] sm:$0xff]
      %v831 = vld [vmem:[%s5 + $0x30] sm:$0xff]
      %v832 = vld [vmem:[%s5 + $0x38] sm:$0xff]
      %v833 = vld [vmem:[%s5 + $0x40] sm:$0xff]
      %v834 = vld [vmem:[%s5 + $0x48] sm:$0xff]
      %v835 = vld [vmem:[%s5 + $0x50] sm:$0xff]
      %v836 = vld [vmem:[%s5 + $0x58] sm:$0xff]
      %v837 = vld [vmem:[%s5 + $0x60] sm:$0xff]
      %v838 = vld [vmem:[%s5 + $0x68] sm:$0xff]
      %v839 = vld [vmem:[%s5 + $0x70] sm:$0xff]
      %v840 = vld [vmem:[%s5 + $0x78] sm:$0xff]
      %v841 = vld [vmem:[%s5 + $0x80] sm:$0xff]
      %v842 = vld [vmem:[%s5 + $0x88] sm:$0xff]
      %v843 = vld [vmem:[%s5 + $0x90] sm:$0xff]
      %v844 = vld [vmem:[%s5 + $0x98] sm:$0xff]
      %v845 = vld [vmem:[%s5 + $0xa0] sm:$0xff]
      %v846 = vld [vmem:[%s5 + $0xa8] sm:$0xff]
      %v847 = vld [vmem:[%s5 + $0xb0] sm:$0xff]
      %v848 = vld [vmem:[%s5 + $0xb8] sm:$0xff]
      %v849 = vld [vmem:[%s5 + $0xc0] sm:$0xff]
      %v850 = vld [vmem:[%s5 + $0xc8] sm:$0xff]
      %v851 = vld [vmem:[%s5 + $0xd0] sm:$0xff]
      %v852 = vld [vmem:[%s5 + $0xd8] sm:$0xff]
      %v853 = vld [vmem:[%s5 + $0xe0] sm:$0xff]
      %v854 = vld [vmem:[%s5 + $0xe8] sm:$0xff]
      %v855 = vld [vmem:[%s5 + $0xf0] sm:$0xff]
      %v856 = vld [vmem:[%s5 + $0xf8] sm:$0xff]
      %v857 = vld [vmem:[%s6] sm:$0x1]
      %v859 = vlaneseq
      %v860 = vshrl.u32 %v859, 7
      %v861 = vsub.s32 0, %v860
      %v862 = vrot.slane %v857, %v861
      %864 = vmatprep.subr.mxu0 0.0
      %865 = vmatpush1.msra.mxu0 %v825
      %866 = vmatprep.subr.mxu0 0.0
      %867 = vmatpush1.msra.mxu0 %v826
      %868 = vmatprep.subr.mxu0 0.0
      %869 = vmatpush1.msra.mxu0 %v827
      %870 = vmatprep.subr.mxu0 0.0
      %871 = vmatpush1.msra.mxu0 %v828
      %872 = vmatprep.subr.mxu0 0.0
      %873 = vmatpush1.msra.mxu0 %v829
      %874 = vmatprep.subr.mxu0 0.0
      %875 = vmatpush1.msra.mxu0 %v830
      %876 = vmatprep.subr.mxu0 0.0
      %877 = vmatpush1.msra.mxu0 %v831
      %878 = vmatprep.subr.mxu0 0.0
      %879 = vmatpush1.msra.mxu0 %v832
      %880 = vmatprep.subr.mxu0 0.0
      %881 = vmatpush1.msra.mxu0 %v833
      %882 = vmatprep.subr.mxu0 0.0
      %883 = vmatpush1.msra.mxu0 %v834
      %884 = vmatprep.subr.mxu0 0.0
      %885 = vmatpush1.msra.mxu0 %v835
      %886 = vmatprep.subr.mxu0 0.0
      %887 = vmatpush1.msra.mxu0 %v836
      %888 = vmatprep.subr.mxu0 0.0
      %889 = vmatpush1.msra.mxu0 %v837
      %890 = vmatprep.subr.mxu0 0.0
      %891 = vmatpush1.msra.mxu0 %v838
      %892 = vmatprep.subr.mxu0 0.0
      %893 = vmatpush1.msra.mxu0 %v839
      %894 = vmatprep.subr.mxu0 0.0
      %895 = vmatpush1.msra.mxu0 %v840
      %896 = vmatprep.subr.mxu0 0.0
      %897 = vmatpush1.msra.mxu0 %v841
      %898 = vmatprep.subr.mxu0 0.0
      %899 = vmatpush1.msra.mxu0 %v842
      %900 = vmatprep.subr.mxu0 0.0
      %901 = vmatpush1.msra.mxu0 %v843
      %902 = vmatprep.subr.mxu0 0.0
      %903 = vmatpush1.msra.mxu0 %v844
      %904 = vmatprep.subr.mxu0 0.0
      %905 = vmatpush1.msra.mxu0 %v845
      %906 = vmatprep.subr.mxu0 0.0
      %907 = vmatpush1.msra.mxu0 %v846
      %908 = vmatprep.subr.mxu0 0.0
      %909 = vmatpush1.msra.mxu0 %v847
      %910 = vmatprep.subr.mxu0 0.0
      %911 = vmatpush1.msra.mxu0 %v848
      %912 = vmatprep.subr.mxu0 0.0
      %913 = vmatpush1.msra.mxu0 %v849
      %914 = vmatprep.subr.mxu0 0.0
      %915 = vmatpush1.msra.mxu0 %v850
      %916 = vmatprep.subr.mxu0 0.0
      %917 = vmatpush1.msra.mxu0 %v851
      %918 = vmatprep.subr.mxu0 0.0
      %919 = vmatpush1.msra.mxu0 %v852
      %920 = vmatprep.subr.mxu0 0.0
      %921 = vmatpush1.msra.mxu0 %v853
      %922 = vmatprep.subr.mxu0 0.0
      %923 = vmatpush1.msra.mxu0 %v854
      %924 = vmatprep.subr.mxu0 0.0
      %925 = vmatpush1.msra.mxu0 %v855
      %926 = vmatprep.subr.mxu0 0.0
      %927 = vmatpush1.msra.mxu0 %v856
      %928 = vmatprep.mubr.f32.mxu0 %v794
      %929 = vmatmul.mubr.f32.gmra.mrb[0].mxu0 %v793
      %v930 = vpop.f32.mrb[0].mxu0
      %v931 = vadd.f32 %v862, %v930
      %v932 = vpop.f32.mrb[0].mxu0
      %933 = vmatprep.mubr.f32.mxu0 %v796
      %934 = vmatmul.mubr.f32.gmra.mrb[0].mxu0 %v795
      %v935 = vpop.f32.mrb[0].mxu0
      %v936 = vadd.f32 %v862, %v935
      %v937 = vpop.f32.mrb[0].mxu0
      %938 = vmatprep.mubr.f32.mxu0 %v798
      %939 = vmatmul.mubr.f32.gmra.mrb[0].mxu0 %v797
      %v940 = vpop.f32.mrb[0].mxu0
      %v941 = vadd.f32 %v862, %v940
      %v942 = vpop.f32.mrb[0].mxu0
      %943 = vmatprep.mubr.f32.mxu0 %v800
      %944 = vmatmul.mubr.f32.gmra.mrb[0].mxu0 %v799
      %v945 = vpop.f32.mrb[0].mxu0
      %v946 = vadd.f32 %v862, %v945
      %v947 = vpop.f32.mrb[0].mxu0
      %948 = vmatprep.mubr.f32.mxu0 %v802
      %949 = vmatmul.mubr.f32.gmra.mrb[0].mxu0 %v801
      %v950 = vpop.f32.mrb[0].mxu0
      %v951 = vadd.f32 %v862, %v950
      %v952 = vpop.f32.mrb[0].mxu0
      %953 = vmatprep.mubr.f32.mxu0 %v804
      %954 = vmatmul.mubr.f32.gmra.mrb[0].mxu0 %v803
      %v955 = vpop.f32.mrb[0].mxu0
      %v956 = vadd.f32 %v862, %v955
      %v957 = vpop.f32.mrb[0].mxu0
      %958 = vmatprep.mubr.f32.mxu0 %v806
      %959 = vmatmul.mubr.f32.gmra.mrb[0].mxu0 %v805
      %v960 = vpop.f32.mrb[0].mxu0
      %v961 = vadd.f32 %v862, %v960
      %v962 = vpop.f32.mrb[0].mxu0
      %963 = vmatprep.mubr.f32.mxu0 %v808
      %964 = vmatmul.mubr.f32.gmra.mrb[0].mxu0 %v807
      %v965 = vpop.f32.mrb[0].mxu0
      %v966 = vadd.f32 %v862, %v965
      %v967 = vpop.f32.mrb[0].mxu0
      %968 = vmatprep.mubr.f32.mxu0 %v810
      %969 = vmatmul.mubr.f32.gmra.mrb[0].mxu0 %v809
      %v970 = vpop.f32.mrb[0].mxu0
      %v971 = vadd.f32 %v862, %v970
      %v972 = vpop.f32.mrb[0].mxu0
      %973 = vmatprep.mubr.f32.mxu0 %v812
      %974 = vmatmul.mubr.f32.gmra.mrb[0].mxu0 %v811
      %v975 = vpop.f32.mrb[0].mxu0
      %v976 = vadd.f32 %v862, %v975
      %v977 = vpop.f32.mrb[0].mxu0
      %978 = vmatprep.mubr.f32.mxu0 %v814
      %979 = vmatmul.mubr.f32.gmra.mrb[0].mxu0 %v813
      %v980 = vpop.f32.mrb[0].mxu0
      %v981 = vadd.f32 %v862, %v980
      %v982 = vpop.f32.mrb[0].mxu0
      %983 = vmatprep.mubr.f32.mxu0 %v816
      %984 = vmatmul.mubr.f32.gmra.mrb[0].mxu0 %v815
      %v985 = vpop.f32.mrb[0].mxu0
      %v986 = vadd.f32 %v862, %v985
      %v987 = vpop.f32.mrb[0].mxu0
      %988 = vmatprep.mubr.f32.mxu0 %v818
      %989 = vmatmul.mubr.f32.gmra.mrb[0].mxu0 %v817
      %v990 = vpop.f32.mrb[0].mxu0
      %v991 = vadd.f32 %v862, %v990
      %v992 = vpop.f32.mrb[0].mxu0
      %993 = vmatprep.mubr.f32.mxu0 %v820
      %994 = vmatmul.mubr.f32.gmra.mrb[0].mxu0 %v819
      %v995 = vpop.f32.mrb[0].mxu0
      %v996 = vadd.f32 %v862, %v995
      %v997 = vpop.f32.mrb[0].mxu0
      %998 = vmatprep.mubr.f32.mxu0 %v822
      %999 = vmatmul.mubr.f32.gmra.mrb[0].mxu0 %v821
      %v1000 = vpop.f32.mrb[0].mxu0
      %v1001 = vadd.f32 %v862, %v1000
      %v1002 = vpop.f32.mrb[0].mxu0
      %1003 = vmatprep.mubr.f32.mxu0 %v824
      %1004 = vmatmul.mubr.f32.gmra.mrb[0].mxu0 %v823
      %v1005 = vpop.f32.mrb[0].mxu0
      %v1006 = vadd.f32 %v862, %v1005
      %v1007 = vpop.f32.mrb[0].mxu0
      %1008 = vdwg.mxu0
      %vm1009 = vcmask 64512
      %v1010 = vsel %vm1009, %v931, -inf
      %1011 = vmax.xlane.f32.xlu0 %v1010
      %v1012 = vpop.xlane.xlu0 %1011
      %v1013 = vsel %vm1009, %v936, -inf
      %1014 = vmax.xlane.f32.xlu0 %v1013
      %v1015 = vpop.xlane.xlu0 %1014
      %v1016 = vsel %vm1009, %v941, -inf
      %1017 = vmax.xlane.f32.xlu0 %v1016
      %v1018 = vpop.xlane.xlu0 %1017
      %v1019 = vsel %vm1009, %v946, -inf
      %1020 = vmax.xlane.f32.xlu0 %v1019
      %v1021 = vpop.xlane.xlu0 %1020
      %v1022 = vsel %vm1009, %v951, -inf
      %1023 = vmax.xlane.f32.xlu0 %v1022
      %v1024 = vpop.xlane.xlu0 %1023
      %v1025 = vsel %vm1009, %v956, -inf
      %1026 = vmax.xlane.f32.xlu0 %v1025
      %v1027 = vpop.xlane.xlu0 %1026
      %v1028 = vsel %vm1009, %v961, -inf
      %1029 = vmax.xlane.f32.xlu0 %v1028
      %v1030 = vpop.xlane.xlu0 %1029
      %v1031 = vsel %vm1009, %v966, -inf
      %1032 = vmax.xlane.f32.xlu0 %v1031
      %v1033 = vpop.xlane.xlu0 %1032
      %v1034 = vsel %vm1009, %v971, -inf
      %1035 = vmax.xlane.f32.xlu0 %v1034
      %v1036 = vpop.xlane.xlu0 %1035
      %v1037 = vsel %vm1009, %v976, -inf
      %1038 = vmax.xlane.f32.xlu0 %v1037
      %v1039 = vpop.xlane.xlu0 %1038
      %v1040 = vsel %vm1009, %v981, -inf
      %1041 = vmax.xlane.f32.xlu0 %v1040
      %v1042 = vpop.xlane.xlu0 %1041
      %v1043 = vsel %vm1009, %v986, -inf
      %1044 = vmax.xlane.f32.xlu0 %v1043
      %v1045 = vpop.xlane.xlu0 %1044
      %v1046 = vsel %vm1009, %v991, -inf
      %1047 = vmax.xlane.f32.xlu0 %v1046
      %v1048 = vpop.xlane.xlu0 %1047
      %v1049 = vsel %vm1009, %v996, -inf
      %1050 = vmax.xlane.f32.xlu0 %v1049
      %v1051 = vpop.xlane.xlu0 %1050
      %v1052 = vsel %vm1009, %v1001, -inf
      %1053 = vmax.xlane.f32.xlu0 %v1052
      %v1054 = vpop.xlane.xlu0 %1053
      %v1055 = vsel %vm1009, %v1006, -inf
      %1056 = vmax.xlane.f32.xlu0 %v1055
      %v1057 = vpop.xlane.xlu0 %1056
      %v1058 = vsub.f32 %v931, %v1012
      %v1059 = vsub.f32 %v936, %v1015
      %v1060 = vsub.f32 %v941, %v1018
      %v1061 = vsub.f32 %v946, %v1021
      %v1062 = vsub.f32 %v951, %v1024
      %v1063 = vsub.f32 %v956, %v1027
      %v1064 = vsub.f32 %v961, %v1030
      %v1065 = vsub.f32 %v966, %v1033
      %v1066 = vsub.f32 %v971, %v1036
      %v1067 = vsub.f32 %v976, %v1039
      %v1068 = vsub.f32 %v981, %v1042
      %v1069 = vsub.f32 %v986, %v1045
      %v1070 = vsub.f32 %v991, %v1048
      %v1071 = vsub.f32 %v996, %v1051
      %v1072 = vsub.f32 %v1001, %v1054
      %v1073 = vsub.f32 %v1006, %v1057
      %v1074 = vmul.f32 %v1058, 1.442695
      %v1075 = vpow.pop %v1074
      %v1076 = vmul.f32 %v1059, 1.442695
      %v1077 = vpow.pop %v1076
      %v1078 = vmul.f32 %v1060, 1.442695
      %v1079 = vpow.pop %v1078
      %v1080 = vmul.f32 %v1061, 1.442695
      %v1081 = vpow.pop %v1080
      %v1082 = vmul.f32 %v1062, 1.442695
      %v1083 = vpow.pop %v1082
      %v1084 = vmul.f32 %v1063, 1.442695
      %v1085 = vpow.pop %v1084
      %v1086 = vmul.f32 %v1064, 1.442695
      %v1087 = vpow.pop %v1086
      %v1088 = vmul.f32 %v1065, 1.442695
      %v1089 = vpow.pop %v1088
      %v1090 = vmul.f32 %v1066, 1.442695
      %v1091 = vpow.pop %v1090
      %v1092 = vmul.f32 %v1067, 1.442695
      %v1093 = vpow.pop %v1092
      %v1094 = vmul.f32 %v1068, 1.442695
      %v1095 = vpow.pop %v1094
      %v1096 = vmul.f32 %v1069, 1.442695
      %v1097 = vpow.pop %v1096
      %v1098 = vmul.f32 %v1070, 1.442695
      %v1099 = vpow.pop %v1098
      %v1100 = vmul.f32 %v1071, 1.442695
      %v1101 = vpow.pop %v1100
      %v1102 = vmul.f32 %v1072, 1.442695
      %v1103 = vpow.pop %v1102
      %v1104 = vmul.f32 %v1073, 1.442695
      %v1105 = vpow.pop %v1104
      %v1106 = vsel %vm1009, %v1075, 0.0
      %1107 = vadd.xlane.f32.xlu0 %v1106
      %v1108 = vpop.xlane.xlu0 %1107
      %v1109 = vsel %vm1009, %v1077, 0.0
      %1110 = vadd.xlane.f32.xlu0 %v1109
      %v1111 = vpop.xlane.xlu0 %1110
      %v1112 = vsel %vm1009, %v1079, 0.0
      %1113 = vadd.xlane.f32.xlu0 %v1112
      %v1114 = vpop.xlane.xlu0 %1113
      %v1115 = vsel %vm1009, %v1081, 0.0
      %1116 = vadd.xlane.f32.xlu0 %v1115
      %v1117 = vpop.xlane.xlu0 %1116
      %v1118 = vsel %vm1009, %v1083, 0.0
      %1119 = vadd.xlane.f32.xlu0 %v1118
      %v1120 = vpop.xlane.xlu0 %1119
      %v1121 = vsel %vm1009, %v1085, 0.0
      %1122 = vadd.xlane.f32.xlu0 %v1121
      %v1123 = vpop.xlane.xlu0 %1122
      %v1124 = vsel %vm1009, %v1087, 0.0
      %1125 = vadd.xlane.f32.xlu0 %v1124
      %v1126 = vpop.xlane.xlu0 %1125
      %v1127 = vsel %vm1009, %v1089, 0.0
      %1128 = vadd.xlane.f32.xlu0 %v1127
      %v1129 = vpop.xlane.xlu0 %1128
      %v1130 = vsel %vm1009, %v1091, 0.0
      %1131 = vadd.xlane.f32.xlu0 %v1130
      %v1132 = vpop.xlane.xlu0 %1131
      %v1133 = vsel %vm1009, %v1093, 0.0
      %1134 = vadd.xlane.f32.xlu0 %v1133
      %v1135 = vpop.xlane.xlu0 %1134
      %v1136 = vsel %vm1009, %v1095, 0.0
      %1137 = vadd.xlane.f32.xlu0 %v1136
      %v1138 = vpop.xlane.xlu0 %1137
      %v1139 = vsel %vm1009, %v1097, 0.0
      %1140 = vadd.xlane.f32.xlu0 %v1139
      %v1141 = vpop.xlane.xlu0 %1140
      %v1142 = vsel %vm1009, %v1099, 0.0
      %1143 = vadd.xlane.f32.xlu0 %v1142
      %v1144 = vpop.xlane.xlu0 %1143
      %v1145 = vsel %vm1009, %v1101, 0.0
      %1146 = vadd.xlane.f32.xlu0 %v1145
      %v1147 = vpop.xlane.xlu0 %1146
      %v1148 = vsel %vm1009, %v1103, 0.0
      %1149 = vadd.xlane.f32.xlu0 %v1148
      %v1150 = vpop.xlane.xlu0 %1149
      %v1151 = vsel %vm1009, %v1105, 0.0
      %1152 = vadd.xlane.f32.xlu0 %v1151
      %v1153 = vpop.xlane.xlu0 %1152
      %v1154 = vrcp.pop %v1108
      %v1155 = vrcp.pop %v1111
      %v1156 = vrcp.pop %v1114
      %v1157 = vrcp.pop %v1117
      %v1158 = vrcp.pop %v1120
      %v1159 = vrcp.pop %v1123
      %v1160 = vrcp.pop %v1126
      %v1161 = vrcp.pop %v1129
      %v1162 = vrcp.pop %v1132
      %v1163 = vrcp.pop %v1135
      %v1164 = vrcp.pop %v1138
      %v1165 = vrcp.pop %v1141
      %v1166 = vrcp.pop %v1144
      %v1167 = vrcp.pop %v1147
      %v1168 = vrcp.pop %v1150
      %v1169 = vrcp.pop %v1153
      %v1170 = vmul.f32 %v1108, %v1154
      %v1171 = vmul.f32 %v1111, %v1155
      %v1172 = vmul.f32 %v1114, %v1156
      %v1173 = vmul.f32 %v1117, %v1157
      %v1174 = vmul.f32 %v1120, %v1158
      %v1175 = vmul.f32 %v1123, %v1159
      %v1176 = vmul.f32 %v1126, %v1160
      %v1177 = vmul.f32 %v1129, %v1161
      %v1178 = vmul.f32 %v1132, %v1162
      %v1179 = vmul.f32 %v1135, %v1163
      %v1180 = vmul.f32 %v1138, %v1164
      %v1181 = vmul.f32 %v1141, %v1165
      %v1182 = vmul.f32 %v1144, %v1166
      %v1183 = vmul.f32 %v1147, %v1167
      %v1184 = vmul.f32 %v1150, %v1168
      %v1185 = vmul.f32 %v1153, %v1169
      %v1186 = vsub.f32 2.0, %v1170
      %v1187 = vsub.f32 2.0, %v1171
      %v1188 = vsub.f32 2.0, %v1172
      %v1189 = vsub.f32 2.0, %v1173
      %v1190 = vsub.f32 2.0, %v1174
      %v1191 = vsub.f32 2.0, %v1175
      %v1192 = vsub.f32 2.0, %v1176
      %v1193 = vsub.f32 2.0, %v1177
      %v1194 = vsub.f32 2.0, %v1178
      %v1195 = vsub.f32 2.0, %v1179
      %v1196 = vsub.f32 2.0, %v1180
      %v1197 = vsub.f32 2.0, %v1181
      %v1198 = vsub.f32 2.0, %v1182
      %v1199 = vsub.f32 2.0, %v1183
      %v1200 = vsub.f32 2.0, %v1184
      %v1201 = vsub.f32 2.0, %v1185
      %v1202 = vmul.f32 %v1154, %v1186
      %v1203 = vmul.f32 %v1155, %v1187
      %v1204 = vmul.f32 %v1156, %v1188
      %v1205 = vmul.f32 %v1157, %v1189
      %v1206 = vmul.f32 %v1158, %v1190
      %v1207 = vmul.f32 %v1159, %v1191
      %v1208 = vmul.f32 %v1160, %v1192
      %v1209 = vmul.f32 %v1161, %v1193
      %v1210 = vmul.f32 %v1162, %v1194
      %v1211 = vmul.f32 %v1163, %v1195
      %v1212 = vmul.f32 %v1164, %v1196
      %v1213 = vmul.f32 %v1165, %v1197
      %v1214 = vmul.f32 %v1166, %v1198
      %v1215 = vmul.f32 %v1167, %v1199
      %v1216 = vmul.f32 %v1168, %v1200
      %v1217 = vmul.f32 %v1169, %v1201
      %v1218 = vmul.f32 %v1108, %v1202
      %v1219 = vmul.f32 %v1111, %v1203
      %v1220 = vmul.f32 %v1114, %v1204
      %v1221 = vmul.f32 %v1117, %v1205
      %v1222 = vmul.f32 %v1120, %v1206
      %v1223 = vmul.f32 %v1123, %v1207
      %v1224 = vmul.f32 %v1126, %v1208
      %v1225 = vmul.f32 %v1129, %v1209
      %v1226 = vmul.f32 %v1132, %v1210
      %v1227 = vmul.f32 %v1135, %v1211
      %v1228 = vmul.f32 %v1138, %v1212
      %v1229 = vmul.f32 %v1141, %v1213
      %v1230 = vmul.f32 %v1144, %v1214
      %v1231 = vmul.f32 %v1147, %v1215
      %v1232 = vmul.f32 %v1150, %v1216
      %v1233 = vmul.f32 %v1153, %v1217
      %v1234 = vsub.f32 2.0, %v1218
      %v1235 = vsub.f32 2.0, %v1219
      %v1236 = vsub.f32 2.0, %v1220
      %v1237 = vsub.f32 2.0, %v1221
      %v1238 = vsub.f32 2.0, %v1222
      %v1239 = vsub.f32 2.0, %v1223
      %v1240 = vsub.f32 2.0, %v1224
      %v1241 = vsub.f32 2.0, %v1225
      %v1242 = vsub.f32 2.0, %v1226
      %v1243 = vsub.f32 2.0, %v1227
      %v1244 = vsub.f32 2.0, %v1228
      %v1245 = vsub.f32 2.0, %v1229
      %v1246 = vsub.f32 2.0, %v1230
      %v1247 = vsub.f32 2.0, %v1231
      %v1248 = vsub.f32 2.0, %v1232
      %v1249 = vsub.f32 2.0, %v1233
      %v1250 = vmul.f32 %v1202, %v1234
      %v1251 = vmul.f32 %v1203, %v1235
      %v1252 = vmul.f32 %v1204, %v1236
      %v1253 = vmul.f32 %v1205, %v1237
      %v1254 = vmul.f32 %v1206, %v1238
      %v1255 = vmul.f32 %v1207, %v1239
      %v1256 = vmul.f32 %v1208, %v1240
      %v1257 = vmul.f32 %v1209, %v1241
      %v1258 = vmul.f32 %v1210, %v1242
      %v1259 = vmul.f32 %v1211, %v1243
      %v1260 = vmul.f32 %v1212, %v1244
      %v1261 = vmul.f32 %v1213, %v1245
      %v1262 = vmul.f32 %v1214, %v1246
      %v1263 = vmul.f32 %v1215, %v1247
      %v1264 = vmul.f32 %v1216, %v1248
      %v1265 = vmul.f32 %v1217, %v1249
      %v1266 = vmul.f32 %v1075, %v1250
      %v1267 = vmul.f32 %v1077, %v1251
      %v1268 = vmul.f32 %v1079, %v1252
      %v1269 = vmul.f32 %v1081, %v1253
      %v1270 = vmul.f32 %v1083, %v1254
      %v1271 = vmul.f32 %v1085, %v1255
      %v1272 = vmul.f32 %v1087, %v1256
      %v1273 = vmul.f32 %v1089, %v1257
      %v1274 = vmul.f32 %v1091, %v1258
      %v1275 = vmul.f32 %v1093, %v1259
      %v1276 = vmul.f32 %v1095, %v1260
      %v1277 = vmul.f32 %v1097, %v1261
      %v1278 = vmul.f32 %v1099, %v1262
      %v1279 = vmul.f32 %v1101, %v1263
      %v1280 = vmul.f32 %v1103, %v1264
      %v1281 = vmul.f32 %v1105, %v1265
      %v1282 = vlog2.pop %v1108
      %v1283 = vmul.f32 %v1282, 0.6931472
      %v1284 = vlog2.pop %v1111
      %v1285 = vmul.f32 %v1284, 0.6931472
      %v1286 = vlog2.pop %v1114
      %v1287 = vmul.f32 %v1286, 0.6931472
      %v1288 = vlog2.pop %v1117
      %v1289 = vmul.f32 %v1288, 0.6931472
      %v1290 = vlog2.pop %v1120
      %v1291 = vmul.f32 %v1290, 0.6931472
      %v1292 = vlog2.pop %v1123
      %v1293 = vmul.f32 %v1292, 0.6931472
      %v1294 = vlog2.pop %v1126
      %v1295 = vmul.f32 %v1294, 0.6931472
      %v1296 = vlog2.pop %v1129
      %v1297 = vmul.f32 %v1296, 0.6931472
      %v1298 = vlog2.pop %v1132
      %v1299 = vmul.f32 %v1298, 0.6931472
      %v1300 = vlog2.pop %v1135
      %v1301 = vmul.f32 %v1300, 0.6931472
      %v1302 = vlog2.pop %v1138
      %v1303 = vmul.f32 %v1302, 0.6931472
      %v1304 = vlog2.pop %v1141
      %v1305 = vmul.f32 %v1304, 0.6931472
      %v1306 = vlog2.pop %v1144
      %v1307 = vmul.f32 %v1306, 0.6931472
      %v1308 = vlog2.pop %v1147
      %v1309 = vmul.f32 %v1308, 0.6931472
      %v1310 = vlog2.pop %v1150
      %v1311 = vmul.f32 %v1310, 0.6931472
      %v1312 = vlog2.pop %v1153
      %v1313 = vmul.f32 %v1312, 0.6931472
      %v1314 = vsub.f32 %v1058, %v1283
      %v1315 = vsub.f32 %v1059, %v1285
      %v1316 = vsub.f32 %v1060, %v1287
      %v1317 = vsub.f32 %v1061, %v1289
      %v1318 = vsub.f32 %v1062, %v1291
      %v1319 = vsub.f32 %v1063, %v1293
      %v1320 = vsub.f32 %v1064, %v1295
      %v1321 = vsub.f32 %v1065, %v1297
      %v1322 = vsub.f32 %v1066, %v1299
      %v1323 = vsub.f32 %v1067, %v1301
      %v1324 = vsub.f32 %v1068, %v1303
      %v1325 = vsub.f32 %v1069, %v1305
      %v1326 = vsub.f32 %v1070, %v1307
      %v1327 = vsub.f32 %v1071, %v1309
      %v1328 = vsub.f32 %v1072, %v1311
      %v1329 = vsub.f32 %v1073, %v1313
      %1346 = vrot.lane.b32.xlu0 %v1314, 8
      %v1347 = vpop.permute.xlu0 %1346
      %1348 = vrot.lane.b32.xlu0 %v1315, 8
      %v1349 = vpop.permute.xlu0 %1348
      %1350 = vrot.lane.b32.xlu0 %v1316, 8
      %v1351 = vpop.permute.xlu0 %1350
      %1352 = vrot.lane.b32.xlu0 %v1317, 8
      %v1353 = vpop.permute.xlu0 %1352
      %1354 = vrot.lane.b32.xlu0 %v1318, 8
      %v1355 = vpop.permute.xlu0 %1354
      %1356 = vrot.lane.b32.xlu0 %v1319, 8
      %v1357 = vpop.permute.xlu0 %1356
      %1358 = vrot.lane.b32.xlu0 %v1320, 8
      %v1359 = vpop.permute.xlu0 %1358
      %1360 = vrot.lane.b32.xlu0 %v1321, 8
      %v1361 = vpop.permute.xlu0 %1360
      %1362 = vrot.lane.b32.xlu0 %v1322, 8
      %v1363 = vpop.permute.xlu0 %1362
      %1364 = vrot.lane.b32.xlu0 %v1323, 8
      %v1365 = vpop.permute.xlu0 %1364
      %1366 = vrot.lane.b32.xlu0 %v1324, 8
      %v1367 = vpop.permute.xlu0 %1366
      %1368 = vrot.lane.b32.xlu0 %v1325, 8
      %v1369 = vpop.permute.xlu0 %1368
      %1370 = vrot.lane.b32.xlu0 %v1326, 8
      %v1371 = vpop.permute.xlu0 %1370
      %1372 = vrot.lane.b32.xlu0 %v1327, 8
      %v1373 = vpop.permute.xlu0 %1372
      %1374 = vrot.lane.b32.xlu0 %v1328, 8
      %v1375 = vpop.permute.xlu0 %1374
      %1376 = vrot.lane.b32.xlu0 %v1329, 8
      %v1377 = vpop.permute.xlu0 %1376
      %v1394 = vsel %vm1009, %v1266, %v1347
      %v1395 = vsel %vm1009, %v1267, %v1349
      %v1396 = vsel %vm1009, %v1268, %v1351
      %v1397 = vsel %vm1009, %v1269, %v1353
      %v1398 = vsel %vm1009, %v1270, %v1355
      %v1399 = vsel %vm1009, %v1271, %v1357
      %v1400 = vsel %vm1009, %v1272, %v1359
      %v1401 = vsel %vm1009, %v1273, %v1361
      %v1402 = vsel %vm1009, %v1274, %v1363
      %v1403 = vsel %vm1009, %v1275, %v1365
      %v1404 = vsel %vm1009, %v1276, %v1367
      %v1405 = vsel %vm1009, %v1277, %v1369
      %v1406 = vsel %vm1009, %v1278, %v1371
      %v1407 = vsel %vm1009, %v1279, %v1373
      %v1408 = vsel %vm1009, %v1280, %v1375
      %v1409 = vsel %vm1009, %v1281, %v1377
      %1410 = vst.msk [vmem:[%s280] sm:$0xff] %vm314, %v1394
      %1411 = vst.msk [vmem:[%s280 + $0x8] sm:$0xff] %vm314, %v1395
      %1412 = vst.msk [vmem:[%s280 + $0x10] sm:$0xff] %vm314, %v1396
      %1413 = vst.msk [vmem:[%s280 + $0x18] sm:$0xff] %vm314, %v1397
      %1414 = vst.msk [vmem:[%s280 + $0x20] sm:$0xff] %vm314, %v1398
      %1415 = vst.msk [vmem:[%s280 + $0x28] sm:$0xff] %vm314, %v1399
      %1416 = vst.msk [vmem:[%s280 + $0x30] sm:$0xff] %vm314, %v1400
      %1417 = vst.msk [vmem:[%s280 + $0x38] sm:$0xff] %vm314, %v1401
      %1418 = vst.msk [vmem:[%s280 + $0x40] sm:$0xff] %vm314, %v1402
      %1419 = vst.msk [vmem:[%s280 + $0x48] sm:$0xff] %vm314, %v1403
      %1420 = vst.msk [vmem:[%s280 + $0x50] sm:$0xff] %vm314, %v1404
      %1421 = vst.msk [vmem:[%s280 + $0x58] sm:$0xff] %vm314, %v1405
      %1422 = vst.msk [vmem:[%s280 + $0x60] sm:$0xff] %vm314, %v1406
      %1423 = vst.msk [vmem:[%s280 + $0x68] sm:$0xff] %vm314, %v1407
      %1424 = vst.msk [vmem:[%s280 + $0x70] sm:$0xff] %vm314, %v1408
      %1425 = vst.msk [vmem:[%s280 + $0x78] sm:$0xff] %vm314, %v1409
      %s1426 = smul.u32 16, %s18
      %p1427 = scmp.lt.s32.totalorder %s1426, 31
      %s1428 = scalar_select %p1427, %s1426, 31
      %s1429 = smul.addr %s1428, 8
      %s1430 = scalar_lea.vmem %s7, %s1429
      // Predicated region
      $region49: #{tpu_custom_call.1} parent=47 // pred_check
        %p1431 = pneg %p188
      $region50: #{tpu_custom_call.1} parent=47 // pred_check_branch
        %1433 = sbr.rel (%p1431) target = $region52
      $region51: #{tpu_custom_call.1} parent=47 // pred_region
        %s1434 = smul.u32 16, %s18
      $region52: #{tpu_custom_call.1} parent=47 // pred_fallthru
        _
    $region48: #{tpu_custom_call.1} parent=5 // pred_fallthru
      _
    %p1435 = scmp.le.s32.totalorder 2, %s13
    // Predicated region
    $region53: #{tpu_custom_call.1} parent=5 // pred_check
      %p1436 = pneg %p1435
    $region54: #{tpu_custom_call.1} parent=5 // pred_check_branch
      %1438 = sbr.rel (%p1436) target = $region56
    $region55: #{tpu_custom_call.1} parent=5 // pred_region
      %s1439 = ssub.s32 %s13, 2
      // Predicated region
      $region57: #{tpu_custom_call.1} parent=55 // pred_check
        %p1440 = pneg %p194
      $region58: #{tpu_custom_call.1} parent=55 // pred_check_branch
        %1442 = sbr.rel (%p1440) target = $region60
      $region59: #{tpu_custom_call.1} parent=55 // pred_region
        %s1443 = smul.u32 16, %s19
        %p1444 = scmp.lt.s32.totalorder %s1443, 31
        %s1445 = scalar_select %p1444, %s1443, 31
        %s1446 = smul.addr %s1445, 8
        %s1447 = scalar_lea.vmem %s7, %s1446
      $region60: #{tpu_custom_call.1} parent=55 // pred_fallthru
        _
    $region56: #{tpu_custom_call.1} parent=5 // pred_fallthru
      _
  $region6: #{tpu_custom_call.1} parent=0 // loop_footer
    %s17 = sadd.s32 1, %s13
  $region7: #{tpu_custom_call.1} parent=0 // loop_footer_branch
    %12 = sbr.rel target = $region3
  $region8: #{tpu_custom_call.1} parent=0 // loop_exit
    _

</llo_original>
